<compile_context>
chip_gen: v7x
topology: tpu7x:2x2x1
jax: 0.10.0
libtpu: 0.0.40
codegen_flags: <defaults>
</compile_context>

<pallas_src>
import functools
import math

import jax
import jax.numpy as jnp
from jax.experimental import pallas as pl
from jax.experimental.pallas import tpu as pltpu


def _embeddings_kernel(ids_ref, lut_hbm, o_ref, rows_vmem, sem, *,
                       scale, block_tokens, num_tokens):
    # ids_ref:  (num_tokens,) int32 in SMEM (scalar prefetch)
    # lut_hbm:  (vocab, d_model) embedding table, left in HBM (pl.ANY)
    # o_ref:    (block_tokens, d_model) output tile in VMEM
    # rows_vmem:(block_tokens, d_model) gather landing buffer in VMEM
    # sem:      single DMA semaphore shared by all row copies of this block
    base = pl.program_id(0) * block_tokens

    # Issue all row-gather DMAs for this block (they overlap in flight).
    for t in range(block_tokens):
        # Clamp the ragged tail to a valid token so every slot issues a legal DMA;
        # Pallas masks the out-of-range output rows on writeback.
        idx = jnp.minimum(base + t, num_tokens - 1)
        tok = ids_ref[idx]
        pltpu.make_async_copy(
            lut_hbm.at[pl.ds(tok, 1), :],
            rows_vmem.at[pl.ds(t, 1), :],
            sem,
        ).start()

    # Drain: wait for all block_tokens copies (same semaphore, same per-copy size).
    for t in range(block_tokens):
        pltpu.make_async_copy(
            lut_hbm.at[pl.ds(0, 1), :],
            rows_vmem.at[pl.ds(t, 1), :],
            sem,
        ).wait()

    # Fused sqrt(d_model) scale; single lane-dense store.
    gathered = rows_vmem[...].astype(jnp.float32) * jnp.float32(scale)
    o_ref[...] = gathered.astype(o_ref.dtype)


def embeddings(token_ids, lut, *, block_tokens=128, vmem_limit_bytes=48 * 1024 * 1024):
    """Embedding lookup + sqrt(d_model) scale.

    token_ids: integer array of any shape (...,)
    lut:       (vocab, d_model) embedding table
    returns:   (..., d_model) array with dtype == lut.dtype
    """
    orig_shape = token_ids.shape
    vocab, d_model = lut.shape

    num_tokens = 1
    for d in orig_shape:
        num_tokens *= d
    ids = token_ids.reshape(num_tokens).astype(jnp.int32)

    # Block of rows per grid step: multiple of 8 sublanes, capped near num_tokens
    # so tiny inputs don't allocate oversized scratch.
    bt = min(block_tokens, max(8, ((num_tokens + 7) // 8) * 8))
    num_blocks = pl.cdiv(num_tokens, bt)

    kernel = functools.partial(
        _embeddings_kernel,
        scale=math.sqrt(d_model),
        block_tokens=bt,
        num_tokens=num_tokens,
    )

    out = pl.pallas_call(
        kernel,
        out_shape=jax.ShapeDtypeStruct((num_tokens, d_model), lut.dtype),
        grid_spec=pltpu.PrefetchScalarGridSpec(
            num_scalar_prefetch=1,          # token ids -> SMEM
            grid=(num_blocks,),
            in_specs=[
                pl.BlockSpec(memory_space=pl.ANY),   # embedding table stays in HBM
            ],
            out_specs=pl.BlockSpec((bt, d_model), lambda i, ids_pref: (i, 0)),
            scratch_shapes=[
                pltpu.VMEM((bt, d_model), lut.dtype),  # gather landing buffer
                pltpu.SemaphoreType.DMA(()),           # shared DMA semaphore
            ],
        ),
        compiler_params=pltpu.CompilerParams(
            dimension_semantics=("parallel",),
            vmem_limit_bytes=vmem_limit_bytes,
        ),
    )(ids, lut)

    return out.reshape(*orig_shape, d_model)


def _reference_embeddings(token_ids, lut):
    return jnp.take(lut, token_ids, axis=0) * jnp.float32(math.sqrt(lut.shape[1]))


if __name__ == "__main__":
    # Small shapes consistent with the module's usage: (batch, seq) int token ids.
    batch, seq = 2, 8
    vocab, d_model = 64, 32

    key = jax.random.PRNGKey(0)
    k_ids, k_lut = jax.random.split(key)
    x = jax.random.randint(k_ids, (batch, seq), 0, vocab, dtype=jnp.int32)
    # Parameter initialized like nn.Embedding's weight (standard normal).
    lut = jax.random.normal(k_lut, (vocab, d_model), dtype=jnp.float32)

    out = embeddings(x, lut)
    out = jax.block_until_ready(out)

    ref = _reference_embeddings(x, lut)
    assert out.shape == (batch, seq, d_model)
    assert jnp.allclose(out, ref, atol=1e-6, rtol=1e-6)

    print("KERNEL_OK")
</pallas_src>

<mosaic_0001>
module attributes {stable_mosaic.version = 11 : i64} {
  func.func @_embeddings_kernel(%arg0: i32, %arg1: memref<16xi32, #tpu.memory_space<smem>>, %arg2: memref<64x32xf32, #tpu.memory_space<any>>, %arg3: memref<16x32xf32, #tpu.memory_space<vmem>>, %arg4: memref<16x32xf32, #tpu.memory_space<vmem>>, %arg5: memref<!tpu.dma_semaphore, #tpu.memory_space<semaphore_mem>>) attributes {dimension_semantics = [#tpu.dimension_semantics<parallel>], iteration_bounds = array<i64: 1>, scalar_prefetch = 1 : i64, scratch_operands = 2 : i64, tpu.core_type = #tpu.core_type<tc>, window_params = [{}, {transform_indices = @transform_1, window_bounds = array<i64: 16, 32>}]} {
    %c16_i32 = arith.constant 16 : i32
    %0 = arith.muli %arg0, %c16_i32 : i32
    %c0_i32 = arith.constant 0 : i32
    %1 = arith.addi %0, %c0_i32 : i32
    %c15_i32 = arith.constant 15 : i32
    %2 = arith.minsi %1, %c15_i32 : i32
    %3 = arith.index_cast %2 : i32 to index
    %4 = memref.load %arg1[%3] : memref<16xi32, #tpu.memory_space<smem>>
    %c0_i32_0 = arith.constant 0 : i32
    %5 = tpu.memref_slice %arg2[%4, %c0_i32_0] : memref<64x32xf32, #tpu.memory_space<any>> -> memref<1x32xf32, #tpu.memory_space<any>>
    %c0_i32_1 = arith.constant 0 : i32
    %c0_i32_2 = arith.constant 0 : i32
    %6 = tpu.memref_slice %arg4[%c0_i32_1, %c0_i32_2] : memref<16x32xf32, #tpu.memory_space<vmem>> -> memref<1x32xf32, #tpu.memory_space<vmem>>
    tpu.enqueue_dma source(%5 : memref<1x32xf32, #tpu.memory_space<any>>) target(%6 : memref<1x32xf32, #tpu.memory_space<vmem>>) target_semaphore(%arg5 : memref<!tpu.dma_semaphore, #tpu.memory_space<semaphore_mem>>)
    %c1_i32 = arith.constant 1 : i32
    %7 = arith.addi %0, %c1_i32 : i32
    %c15_i32_3 = arith.constant 15 : i32
    %8 = arith.minsi %7, %c15_i32_3 : i32
    %9 = arith.index_cast %8 : i32 to index
    %10 = memref.load %arg1[%9] : memref<16xi32, #tpu.memory_space<smem>>
    %c0_i32_4 = arith.constant 0 : i32
    %11 = tpu.memref_slice %arg2[%10, %c0_i32_4] : memref<64x32xf32, #tpu.memory_space<any>> -> memref<1x32xf32, #tpu.memory_space<any>>
    %c1_i32_5 = arith.constant 1 : i32
    %c0_i32_6 = arith.constant 0 : i32
    %12 = tpu.memref_slice %arg4[%c1_i32_5, %c0_i32_6] : memref<16x32xf32, #tpu.memory_space<vmem>> -> memref<1x32xf32, #tpu.memory_space<vmem>>
    tpu.enqueue_dma source(%11 : memref<1x32xf32, #tpu.memory_space<any>>) target(%12 : memref<1x32xf32, #tpu.memory_space<vmem>>) target_semaphore(%arg5 : memref<!tpu.dma_semaphore, #tpu.memory_space<semaphore_mem>>)
    %c2_i32 = arith.constant 2 : i32
    %13 = arith.addi %0, %c2_i32 : i32
    %c15_i32_7 = arith.constant 15 : i32
    %14 = arith.minsi %13, %c15_i32_7 : i32
    %15 = arith.index_cast %14 : i32 to index
    %16 = memref.load %arg1[%15] : memref<16xi32, #tpu.memory_space<smem>>
    %c0_i32_8 = arith.constant 0 : i32
    %17 = tpu.memref_slice %arg2[%16, %c0_i32_8] : memref<64x32xf32, #tpu.memory_space<any>> -> memref<1x32xf32, #tpu.memory_space<any>>
    %c2_i32_9 = arith.constant 2 : i32
    %c0_i32_10 = arith.constant 0 : i32
    %18 = tpu.memref_slice %arg4[%c2_i32_9, %c0_i32_10] : memref<16x32xf32, #tpu.memory_space<vmem>> -> memref<1x32xf32, #tpu.memory_space<vmem>>
    tpu.enqueue_dma source(%17 : memref<1x32xf32, #tpu.memory_space<any>>) target(%18 : memref<1x32xf32, #tpu.memory_space<vmem>>) target_semaphore(%arg5 : memref<!tpu.dma_semaphore, #tpu.memory_space<semaphore_mem>>)
    %c3_i32 = arith.constant 3 : i32
    %19 = arith.addi %0, %c3_i32 : i32
    %c15_i32_11 = arith.constant 15 : i32
    %20 = arith.minsi %19, %c15_i32_11 : i32
    %21 = arith.index_cast %20 : i32 to index
    %22 = memref.load %arg1[%21] : memref<16xi32, #tpu.memory_space<smem>>
    %c0_i32_12 = arith.constant 0 : i32
    %23 = tpu.memref_slice %arg2[%22, %c0_i32_12] : memref<64x32xf32, #tpu.memory_space<any>> -> memref<1x32xf32, #tpu.memory_space<any>>
    %c3_i32_13 = arith.constant 3 : i32
    %c0_i32_14 = arith.constant 0 : i32
    %24 = tpu.memref_slice %arg4[%c3_i32_13, %c0_i32_14] : memref<16x32xf32, #tpu.memory_space<vmem>> -> memref<1x32xf32, #tpu.memory_space<vmem>>
    tpu.enqueue_dma source(%23 : memref<1x32xf32, #tpu.memory_space<any>>) target(%24 : memref<1x32xf32, #tpu.memory_space<vmem>>) target_semaphore(%arg5 : memref<!tpu.dma_semaphore, #tpu.memory_space<semaphore_mem>>)
    %c4_i32 = arith.constant 4 : i32
    %25 = arith.addi %0, %c4_i32 : i32
    %c15_i32_15 = arith.constant 15 : i32
    %26 = arith.minsi %25, %c15_i32_15 : i32
    %27 = arith.index_cast %26 : i32 to index
    %28 = memref.load %arg1[%27] : memref<16xi32, #tpu.memory_space<smem>>
    %c0_i32_16 = arith.constant 0 : i32
    %29 = tpu.memref_slice %arg2[%28, %c0_i32_16] : memref<64x32xf32, #tpu.memory_space<any>> -> memref<1x32xf32, #tpu.memory_space<any>>
    %c4_i32_17 = arith.constant 4 : i32
    %c0_i32_18 = arith.constant 0 : i32
    %30 = tpu.memref_slice %arg4[%c4_i32_17, %c0_i32_18] : memref<16x32xf32, #tpu.memory_space<vmem>> -> memref<1x32xf32, #tpu.memory_space<vmem>>
    tpu.enqueue_dma source(%29 : memref<1x32xf32, #tpu.memory_space<any>>) target(%30 : memref<1x32xf32, #tpu.memory_space<vmem>>) target_semaphore(%arg5 : memref<!tpu.dma_semaphore, #tpu.memory_space<semaphore_mem>>)
    %c5_i32 = arith.constant 5 : i32
    %31 = arith.addi %0, %c5_i32 : i32
    %c15_i32_19 = arith.constant 15 : i32
    %32 = arith.minsi %31, %c15_i32_19 : i32
    %33 = arith.index_cast %32 : i32 to index
    %34 = memref.load %arg1[%33] : memref<16xi32, #tpu.memory_space<smem>>
    %c0_i32_20 = arith.constant 0 : i32
    %35 = tpu.memref_slice %arg2[%34, %c0_i32_20] : memref<64x32xf32, #tpu.memory_space<any>> -> memref<1x32xf32, #tpu.memory_space<any>>
    %c5_i32_21 = arith.constant 5 : i32
    %c0_i32_22 = arith.constant 0 : i32
    %36 = tpu.memref_slice %arg4[%c5_i32_21, %c0_i32_22] : memref<16x32xf32, #tpu.memory_space<vmem>> -> memref<1x32xf32, #tpu.memory_space<vmem>>
    tpu.enqueue_dma source(%35 : memref<1x32xf32, #tpu.memory_space<any>>) target(%36 : memref<1x32xf32, #tpu.memory_space<vmem>>) target_semaphore(%arg5 : memref<!tpu.dma_semaphore, #tpu.memory_space<semaphore_mem>>)
    %c6_i32 = arith.constant 6 : i32
    %37 = arith.addi %0, %c6_i32 : i32
    %c15_i32_23 = arith.constant 15 : i32
    %38 = arith.minsi %37, %c15_i32_23 : i32
    %39 = arith.index_cast %38 : i32 to index
    %40 = memref.load %arg1[%39] : memref<16xi32, #tpu.memory_space<smem>>
    %c0_i32_24 = arith.constant 0 : i32
    %41 = tpu.memref_slice %arg2[%40, %c0_i32_24] : memref<64x32xf32, #tpu.memory_space<any>> -> memref<1x32xf32, #tpu.memory_space<any>>
    %c6_i32_25 = arith.constant 6 : i32
    %c0_i32_26 = arith.constant 0 : i32
    %42 = tpu.memref_slice %arg4[%c6_i32_25, %c0_i32_26] : memref<16x32xf32, #tpu.memory_space<vmem>> -> memref<1x32xf32, #tpu.memory_space<vmem>>
    tpu.enqueue_dma source(%41 : memref<1x32xf32, #tpu.memory_space<any>>) target(%42 : memref<1x32xf32, #tpu.memory_space<vmem>>) target_semaphore(%arg5 : memref<!tpu.dma_semaphore, #tpu.memory_space<semaphore_mem>>)
    %c7_i32 = arith.constant 7 : i32
    %43 = arith.addi %0, %c7_i32 : i32
    %c15_i32_27 = arith.constant 15 : i32
    %44 = arith.minsi %43, %c15_i32_27 : i32
    %45 = arith.index_cast %44 : i32 to index
    %46 = memref.load %arg1[%45] : memref<16xi32, #tpu.memory_space<smem>>
    %c0_i32_28 = arith.constant 0 : i32
    %47 = tpu.memref_slice %arg2[%46, %c0_i32_28] : memref<64x32xf32, #tpu.memory_space<any>> -> memref<1x32xf32, #tpu.memory_space<any>>
    %c7_i32_29 = arith.constant 7 : i32
    %c0_i32_30 = arith.constant 0 : i32
    %48 = tpu.memref_slice %arg4[%c7_i32_29, %c0_i32_30] : memref<16x32xf32, #tpu.memory_space<vmem>> -> memref<1x32xf32, #tpu.memory_space<vmem>>
    tpu.enqueue_dma source(%47 : memref<1x32xf32, #tpu.memory_space<any>>) target(%48 : memref<1x32xf32, #tpu.memory_space<vmem>>) target_semaphore(%arg5 : memref<!tpu.dma_semaphore, #tpu.memory_space<semaphore_mem>>)
    %c8_i32 = arith.constant 8 : i32
    %49 = arith.addi %0, %c8_i32 : i32
    %c15_i32_31 = arith.constant 15 : i32
    %50 = arith.minsi %49, %c15_i32_31 : i32
    %51 = arith.index_cast %50 : i32 to index
    %52 = memref.load %arg1[%51] : memref<16xi32, #tpu.memory_space<smem>>
    %c0_i32_32 = arith.constant 0 : i32
    %53 = tpu.memref_slice %arg2[%52, %c0_i32_32] : memref<64x32xf32, #tpu.memory_space<any>> -> memref<1x32xf32, #tpu.memory_space<any>>
    %c8_i32_33 = arith.constant 8 : i32
    %c0_i32_34 = arith.constant 0 : i32
    %54 = tpu.memref_slice %arg4[%c8_i32_33, %c0_i32_34] : memref<16x32xf32, #tpu.memory_space<vmem>> -> memref<1x32xf32, #tpu.memory_space<vmem>>
    tpu.enqueue_dma source(%53 : memref<1x32xf32, #tpu.memory_space<any>>) target(%54 : memref<1x32xf32, #tpu.memory_space<vmem>>) target_semaphore(%arg5 : memref<!tpu.dma_semaphore, #tpu.memory_space<semaphore_mem>>)
    %c9_i32 = arith.constant 9 : i32
    %55 = arith.addi %0, %c9_i32 : i32
    %c15_i32_35 = arith.constant 15 : i32
    %56 = arith.minsi %55, %c15_i32_35 : i32
    %57 = arith.index_cast %56 : i32 to index
    %58 = memref.load %arg1[%57] : memref<16xi32, #tpu.memory_space<smem>>
    %c0_i32_36 = arith.constant 0 : i32
    %59 = tpu.memref_slice %arg2[%58, %c0_i32_36] : memref<64x32xf32, #tpu.memory_space<any>> -> memref<1x32xf32, #tpu.memory_space<any>>
    %c9_i32_37 = arith.constant 9 : i32
    %c0_i32_38 = arith.constant 0 : i32
    %60 = tpu.memref_slice %arg4[%c9_i32_37, %c0_i32_38] : memref<16x32xf32, #tpu.memory_space<vmem>> -> memref<1x32xf32, #tpu.memory_space<vmem>>
    tpu.enqueue_dma source(%59 : memref<1x32xf32, #tpu.memory_space<any>>) target(%60 : memref<1x32xf32, #tpu.memory_space<vmem>>) target_semaphore(%arg5 : memref<!tpu.dma_semaphore, #tpu.memory_space<semaphore_mem>>)
    %c10_i32 = arith.constant 10 : i32
    %61 = arith.addi %0, %c10_i32 : i32
    %c15_i32_39 = arith.constant 15 : i32
    %62 = arith.minsi %61, %c15_i32_39 : i32
    %63 = arith.index_cast %62 : i32 to index
    %64 = memref.load %arg1[%63] : memref<16xi32, #tpu.memory_space<smem>>
    %c0_i32_40 = arith.constant 0 : i32
    %65 = tpu.memref_slice %arg2[%64, %c0_i32_40] : memref<64x32xf32, #tpu.memory_space<any>> -> memref<1x32xf32, #tpu.memory_space<any>>
    %c10_i32_41 = arith.constant 10 : i32
    %c0_i32_42 = arith.constant 0 : i32
    %66 = tpu.memref_slice %arg4[%c10_i32_41, %c0_i32_42] : memref<16x32xf32, #tpu.memory_space<vmem>> -> memref<1x32xf32, #tpu.memory_space<vmem>>
    tpu.enqueue_dma source(%65 : memref<1x32xf32, #tpu.memory_space<any>>) target(%66 : memref<1x32xf32, #tpu.memory_space<vmem>>) target_semaphore(%arg5 : memref<!tpu.dma_semaphore, #tpu.memory_space<semaphore_mem>>)
    %c11_i32 = arith.constant 11 : i32
    %67 = arith.addi %0, %c11_i32 : i32
    %c15_i32_43 = arith.constant 15 : i32
    %68 = arith.minsi %67, %c15_i32_43 : i32
    %69 = arith.index_cast %68 : i32 to index
    %70 = memref.load %arg1[%69] : memref<16xi32, #tpu.memory_space<smem>>
    %c0_i32_44 = arith.constant 0 : i32
    %71 = tpu.memref_slice %arg2[%70, %c0_i32_44] : memref<64x32xf32, #tpu.memory_space<any>> -> memref<1x32xf32, #tpu.memory_space<any>>
    %c11_i32_45 = arith.constant 11 : i32
    %c0_i32_46 = arith.constant 0 : i32
    %72 = tpu.memref_slice %arg4[%c11_i32_45, %c0_i32_46] : memref<16x32xf32, #tpu.memory_space<vmem>> -> memref<1x32xf32, #tpu.memory_space<vmem>>
    tpu.enqueue_dma source(%71 : memref<1x32xf32, #tpu.memory_space<any>>) target(%72 : memref<1x32xf32, #tpu.memory_space<vmem>>) target_semaphore(%arg5 : memref<!tpu.dma_semaphore, #tpu.memory_space<semaphore_mem>>)
    %c12_i32 = arith.constant 12 : i32
    %73 = arith.addi %0, %c12_i32 : i32
    %c15_i32_47 = arith.constant 15 : i32
    %74 = arith.minsi %73, %c15_i32_47 : i32
    %75 = arith.index_cast %74 : i32 to index
    %76 = memref.load %arg1[%75] : memref<16xi32, #tpu.memory_space<smem>>
    %c0_i32_48 = arith.constant 0 : i32
    %77 = tpu.memref_slice %arg2[%76, %c0_i32_48] : memref<64x32xf32, #tpu.memory_space<any>> -> memref<1x32xf32, #tpu.memory_space<any>>
    %c12_i32_49 = arith.constant 12 : i32
    %c0_i32_50 = arith.constant 0 : i32
    %78 = tpu.memref_slice %arg4[%c12_i32_49, %c0_i32_50] : memref<16x32xf32, #tpu.memory_space<vmem>> -> memref<1x32xf32, #tpu.memory_space<vmem>>
    tpu.enqueue_dma source(%77 : memref<1x32xf32, #tpu.memory_space<any>>) target(%78 : memref<1x32xf32, #tpu.memory_space<vmem>>) target_semaphore(%arg5 : memref<!tpu.dma_semaphore, #tpu.memory_space<semaphore_mem>>)
    %c13_i32 = arith.constant 13 : i32
    %79 = arith.addi %0, %c13_i32 : i32
    %c15_i32_51 = arith.constant 15 : i32
    %80 = arith.minsi %79, %c15_i32_51 : i32
    %81 = arith.index_cast %80 : i32 to index
    %82 = memref.load %arg1[%81] : memref<16xi32, #tpu.memory_space<smem>>
    %c0_i32_52 = arith.constant 0 : i32
    %83 = tpu.memref_slice %arg2[%82, %c0_i32_52] : memref<64x32xf32, #tpu.memory_space<any>> -> memref<1x32xf32, #tpu.memory_space<any>>
    %c13_i32_53 = arith.constant 13 : i32
    %c0_i32_54 = arith.constant 0 : i32
    %84 = tpu.memref_slice %arg4[%c13_i32_53, %c0_i32_54] : memref<16x32xf32, #tpu.memory_space<vmem>> -> memref<1x32xf32, #tpu.memory_space<vmem>>
    tpu.enqueue_dma source(%83 : memref<1x32xf32, #tpu.memory_space<any>>) target(%84 : memref<1x32xf32, #tpu.memory_space<vmem>>) target_semaphore(%arg5 : memref<!tpu.dma_semaphore, #tpu.memory_space<semaphore_mem>>)
    %c14_i32 = arith.constant 14 : i32
    %85 = arith.addi %0, %c14_i32 : i32
    %c15_i32_55 = arith.constant 15 : i32
    %86 = arith.minsi %85, %c15_i32_55 : i32
    %87 = arith.index_cast %86 : i32 to index
    %88 = memref.load %arg1[%87] : memref<16xi32, #tpu.memory_space<smem>>
    %c0_i32_56 = arith.constant 0 : i32
    %89 = tpu.memref_slice %arg2[%88, %c0_i32_56] : memref<64x32xf32, #tpu.memory_space<any>> -> memref<1x32xf32, #tpu.memory_space<any>>
    %c14_i32_57 = arith.constant 14 : i32
    %c0_i32_58 = arith.constant 0 : i32
    %90 = tpu.memref_slice %arg4[%c14_i32_57, %c0_i32_58] : memref<16x32xf32, #tpu.memory_space<vmem>> -> memref<1x32xf32, #tpu.memory_space<vmem>>
    tpu.enqueue_dma source(%89 : memref<1x32xf32, #tpu.memory_space<any>>) target(%90 : memref<1x32xf32, #tpu.memory_space<vmem>>) target_semaphore(%arg5 : memref<!tpu.dma_semaphore, #tpu.memory_space<semaphore_mem>>)
    %c15_i32_59 = arith.constant 15 : i32
    %91 = arith.addi %0, %c15_i32_59 : i32
    %c15_i32_60 = arith.constant 15 : i32
    %92 = arith.minsi %91, %c15_i32_60 : i32
    %93 = arith.index_cast %92 : i32 to index
    %94 = memref.load %arg1[%93] : memref<16xi32, #tpu.memory_space<smem>>
    %c0_i32_61 = arith.constant 0 : i32
    %95 = tpu.memref_slice %arg2[%94, %c0_i32_61] : memref<64x32xf32, #tpu.memory_space<any>> -> memref<1x32xf32, #tpu.memory_space<any>>
    %c15_i32_62 = arith.constant 15 : i32
    %c0_i32_63 = arith.constant 0 : i32
    %96 = tpu.memref_slice %arg4[%c15_i32_62, %c0_i32_63] : memref<16x32xf32, #tpu.memory_space<vmem>> -> memref<1x32xf32, #tpu.memory_space<vmem>>
    tpu.enqueue_dma source(%95 : memref<1x32xf32, #tpu.memory_space<any>>) target(%96 : memref<1x32xf32, #tpu.memory_space<vmem>>) target_semaphore(%arg5 : memref<!tpu.dma_semaphore, #tpu.memory_space<semaphore_mem>>)
    %c0_i32_64 = arith.constant 0 : i32
    %c0_i32_65 = arith.constant 0 : i32
    %97 = tpu.memref_slice %arg2[%c0_i32_64, %c0_i32_65] : memref<64x32xf32, #tpu.memory_space<any>> -> memref<1x32xf32, #tpu.memory_space<any>>
    %c0_i32_66 = arith.constant 0 : i32
    %c0_i32_67 = arith.constant 0 : i32
    %98 = tpu.memref_slice %arg4[%c0_i32_66, %c0_i32_67] : memref<16x32xf32, #tpu.memory_space<vmem>> -> memref<1x32xf32, #tpu.memory_space<vmem>>
    tpu.wait_dma2 semaphore(%arg5 : memref<!tpu.dma_semaphore, #tpu.memory_space<semaphore_mem>>) src(%97 : memref<1x32xf32, #tpu.memory_space<any>>) dst(%98 : memref<1x32xf32, #tpu.memory_space<vmem>>)
    %c0_i32_68 = arith.constant 0 : i32
    %c0_i32_69 = arith.constant 0 : i32
    %99 = tpu.memref_slice %arg2[%c0_i32_68, %c0_i32_69] : memref<64x32xf32, #tpu.memory_space<any>> -> memref<1x32xf32, #tpu.memory_space<any>>
    %c1_i32_70 = arith.constant 1 : i32
    %c0_i32_71 = arith.constant 0 : i32
    %100 = tpu.memref_slice %arg4[%c1_i32_70, %c0_i32_71] : memref<16x32xf32, #tpu.memory_space<vmem>> -> memref<1x32xf32, #tpu.memory_space<vmem>>
    tpu.wait_dma2 semaphore(%arg5 : memref<!tpu.dma_semaphore, #tpu.memory_space<semaphore_mem>>) src(%99 : memref<1x32xf32, #tpu.memory_space<any>>) dst(%100 : memref<1x32xf32, #tpu.memory_space<vmem>>)
    %c0_i32_72 = arith.constant 0 : i32
    %c0_i32_73 = arith.constant 0 : i32
    %101 = tpu.memref_slice %arg2[%c0_i32_72, %c0_i32_73] : memref<64x32xf32, #tpu.memory_space<any>> -> memref<1x32xf32, #tpu.memory_space<any>>
    %c2_i32_74 = arith.constant 2 : i32
    %c0_i32_75 = arith.constant 0 : i32
    %102 = tpu.memref_slice %arg4[%c2_i32_74, %c0_i32_75] : memref<16x32xf32, #tpu.memory_space<vmem>> -> memref<1x32xf32, #tpu.memory_space<vmem>>
    tpu.wait_dma2 semaphore(%arg5 : memref<!tpu.dma_semaphore, #tpu.memory_space<semaphore_mem>>) src(%101 : memref<1x32xf32, #tpu.memory_space<any>>) dst(%102 : memref<1x32xf32, #tpu.memory_space<vmem>>)
    %c0_i32_76 = arith.constant 0 : i32
    %c0_i32_77 = arith.constant 0 : i32
    %103 = tpu.memref_slice %arg2[%c0_i32_76, %c0_i32_77] : memref<64x32xf32, #tpu.memory_space<any>> -> memref<1x32xf32, #tpu.memory_space<any>>
    %c3_i32_78 = arith.constant 3 : i32
    %c0_i32_79 = arith.constant 0 : i32
    %104 = tpu.memref_slice %arg4[%c3_i32_78, %c0_i32_79] : memref<16x32xf32, #tpu.memory_space<vmem>> -> memref<1x32xf32, #tpu.memory_space<vmem>>
    tpu.wait_dma2 semaphore(%arg5 : memref<!tpu.dma_semaphore, #tpu.memory_space<semaphore_mem>>) src(%103 : memref<1x32xf32, #tpu.memory_space<any>>) dst(%104 : memref<1x32xf32, #tpu.memory_space<vmem>>)
    %c0_i32_80 = arith.constant 0 : i32
    %c0_i32_81 = arith.constant 0 : i32
    %105 = tpu.memref_slice %arg2[%c0_i32_80, %c0_i32_81] : memref<64x32xf32, #tpu.memory_space<any>> -> memref<1x32xf32, #tpu.memory_space<any>>
    %c4_i32_82 = arith.constant 4 : i32
    %c0_i32_83 = arith.constant 0 : i32
    %106 = tpu.memref_slice %arg4[%c4_i32_82, %c0_i32_83] : memref<16x32xf32, #tpu.memory_space<vmem>> -> memref<1x32xf32, #tpu.memory_space<vmem>>
    tpu.wait_dma2 semaphore(%arg5 : memref<!tpu.dma_semaphore, #tpu.memory_space<semaphore_mem>>) src(%105 : memref<1x32xf32, #tpu.memory_space<any>>) dst(%106 : memref<1x32xf32, #tpu.memory_space<vmem>>)
    %c0_i32_84 = arith.constant 0 : i32
    %c0_i32_85 = arith.constant 0 : i32
    %107 = tpu.memref_slice %arg2[%c0_i32_84, %c0_i32_85] : memref<64x32xf32, #tpu.memory_space<any>> -> memref<1x32xf32, #tpu.memory_space<any>>
    %c5_i32_86 = arith.constant 5 : i32
    %c0_i32_87 = arith.constant 0 : i32
    %108 = tpu.memref_slice %arg4[%c5_i32_86, %c0_i32_87] : memref<16x32xf32, #tpu.memory_space<vmem>> -> memref<1x32xf32, #tpu.memory_space<vmem>>
    tpu.wait_dma2 semaphore(%arg5 : memref<!tpu.dma_semaphore, #tpu.memory_space<semaphore_mem>>) src(%107 : memref<1x32xf32, #tpu.memory_space<any>>) dst(%108 : memref<1x32xf32, #tpu.memory_space<vmem>>)
    %c0_i32_88 = arith.constant 0 : i32
    %c0_i32_89 = arith.constant 0 : i32
    %109 = tpu.memref_slice %arg2[%c0_i32_88, %c0_i32_89] : memref<64x32xf32, #tpu.memory_space<any>> -> memref<1x32xf32, #tpu.memory_space<any>>
    %c6_i32_90 = arith.constant 6 : i32
    %c0_i32_91 = arith.constant 0 : i32
    %110 = tpu.memref_slice %arg4[%c6_i32_90, %c0_i32_91] : memref<16x32xf32, #tpu.memory_space<vmem>> -> memref<1x32xf32, #tpu.memory_space<vmem>>
    tpu.wait_dma2 semaphore(%arg5 : memref<!tpu.dma_semaphore, #tpu.memory_space<semaphore_mem>>) src(%109 : memref<1x32xf32, #tpu.memory_space<any>>) dst(%110 : memref<1x32xf32, #tpu.memory_space<vmem>>)
    %c0_i32_92 = arith.constant 0 : i32
    %c0_i32_93 = arith.constant 0 : i32
    %111 = tpu.memref_slice %arg2[%c0_i32_92, %c0_i32_93] : memref<64x32xf32, #tpu.memory_space<any>> -> memref<1x32xf32, #tpu.memory_space<any>>
    %c7_i32_94 = arith.constant 7 : i32
    %c0_i32_95 = arith.constant 0 : i32
    %112 = tpu.memref_slice %arg4[%c7_i32_94, %c0_i32_95] : memref<16x32xf32, #tpu.memory_space<vmem>> -> memref<1x32xf32, #tpu.memory_space<vmem>>
    tpu.wait_dma2 semaphore(%arg5 : memref<!tpu.dma_semaphore, #tpu.memory_space<semaphore_mem>>) src(%111 : memref<1x32xf32, #tpu.memory_space<any>>) dst(%112 : memref<1x32xf32, #tpu.memory_space<vmem>>)
    %c0_i32_96 = arith.constant 0 : i32
    %c0_i32_97 = arith.constant 0 : i32
    %113 = tpu.memref_slice %arg2[%c0_i32_96, %c0_i32_97] : memref<64x32xf32, #tpu.memory_space<any>> -> memref<1x32xf32, #tpu.memory_space<any>>
    %c8_i32_98 = arith.constant 8 : i32
    %c0_i32_99 = arith.constant 0 : i32
    %114 = tpu.memref_slice %arg4[%c8_i32_98, %c0_i32_99] : memref<16x32xf32, #tpu.memory_space<vmem>> -> memref<1x32xf32, #tpu.memory_space<vmem>>
    tpu.wait_dma2 semaphore(%arg5 : memref<!tpu.dma_semaphore, #tpu.memory_space<semaphore_mem>>) src(%113 : memref<1x32xf32, #tpu.memory_space<any>>) dst(%114 : memref<1x32xf32, #tpu.memory_space<vmem>>)
    %c0_i32_100 = arith.constant 0 : i32
    %c0_i32_101 = arith.constant 0 : i32
    %115 = tpu.memref_slice %arg2[%c0_i32_100, %c0_i32_101] : memref<64x32xf32, #tpu.memory_space<any>> -> memref<1x32xf32, #tpu.memory_space<any>>
    %c9_i32_102 = arith.constant 9 : i32
    %c0_i32_103 = arith.constant 0 : i32
    %116 = tpu.memref_slice %arg4[%c9_i32_102, %c0_i32_103] : memref<16x32xf32, #tpu.memory_space<vmem>> -> memref<1x32xf32, #tpu.memory_space<vmem>>
    tpu.wait_dma2 semaphore(%arg5 : memref<!tpu.dma_semaphore, #tpu.memory_space<semaphore_mem>>) src(%115 : memref<1x32xf32, #tpu.memory_space<any>>) dst(%116 : memref<1x32xf32, #tpu.memory_space<vmem>>)
    %c0_i32_104 = arith.constant 0 : i32
    %c0_i32_105 = arith.constant 0 : i32
    %117 = tpu.memref_slice %arg2[%c0_i32_104, %c0_i32_105] : memref<64x32xf32, #tpu.memory_space<any>> -> memref<1x32xf32, #tpu.memory_space<any>>
    %c10_i32_106 = arith.constant 10 : i32
    %c0_i32_107 = arith.constant 0 : i32
    %118 = tpu.memref_slice %arg4[%c10_i32_106, %c0_i32_107] : memref<16x32xf32, #tpu.memory_space<vmem>> -> memref<1x32xf32, #tpu.memory_space<vmem>>
    tpu.wait_dma2 semaphore(%arg5 : memref<!tpu.dma_semaphore, #tpu.memory_space<semaphore_mem>>) src(%117 : memref<1x32xf32, #tpu.memory_space<any>>) dst(%118 : memref<1x32xf32, #tpu.memory_space<vmem>>)
    %c0_i32_108 = arith.constant 0 : i32
    %c0_i32_109 = arith.constant 0 : i32
    %119 = tpu.memref_slice %arg2[%c0_i32_108, %c0_i32_109] : memref<64x32xf32, #tpu.memory_space<any>> -> memref<1x32xf32, #tpu.memory_space<any>>
    %c11_i32_110 = arith.constant 11 : i32
    %c0_i32_111 = arith.constant 0 : i32
    %120 = tpu.memref_slice %arg4[%c11_i32_110, %c0_i32_111] : memref<16x32xf32, #tpu.memory_space<vmem>> -> memref<1x32xf32, #tpu.memory_space<vmem>>
    tpu.wait_dma2 semaphore(%arg5 : memref<!tpu.dma_semaphore, #tpu.memory_space<semaphore_mem>>) src(%119 : memref<1x32xf32, #tpu.memory_space<any>>) dst(%120 : memref<1x32xf32, #tpu.memory_space<vmem>>)
    %c0_i32_112 = arith.constant 0 : i32
    %c0_i32_113 = arith.constant 0 : i32
    %121 = tpu.memref_slice %arg2[%c0_i32_112, %c0_i32_113] : memref<64x32xf32, #tpu.memory_space<any>> -> memref<1x32xf32, #tpu.memory_space<any>>
    %c12_i32_114 = arith.constant 12 : i32
    %c0_i32_115 = arith.constant 0 : i32
    %122 = tpu.memref_slice %arg4[%c12_i32_114, %c0_i32_115] : memref<16x32xf32, #tpu.memory_space<vmem>> -> memref<1x32xf32, #tpu.memory_space<vmem>>
    tpu.wait_dma2 semaphore(%arg5 : memref<!tpu.dma_semaphore, #tpu.memory_space<semaphore_mem>>) src(%121 : memref<1x32xf32, #tpu.memory_space<any>>) dst(%122 : memref<1x32xf32, #tpu.memory_space<vmem>>)
    %c0_i32_116 = arith.constant 0 : i32
    %c0_i32_117 = arith.constant 0 : i32
    %123 = tpu.memref_slice %arg2[%c0_i32_116, %c0_i32_117] : memref<64x32xf32, #tpu.memory_space<any>> -> memref<1x32xf32, #tpu.memory_space<any>>
    %c13_i32_118 = arith.constant 13 : i32
    %c0_i32_119 = arith.constant 0 : i32
    %124 = tpu.memref_slice %arg4[%c13_i32_118, %c0_i32_119] : memref<16x32xf32, #tpu.memory_space<vmem>> -> memref<1x32xf32, #tpu.memory_space<vmem>>
    tpu.wait_dma2 semaphore(%arg5 : memref<!tpu.dma_semaphore, #tpu.memory_space<semaphore_mem>>) src(%123 : memref<1x32xf32, #tpu.memory_space<any>>) dst(%124 : memref<1x32xf32, #tpu.memory_space<vmem>>)
    %c0_i32_120 = arith.constant 0 : i32
    %c0_i32_121 = arith.constant 0 : i32
    %125 = tpu.memref_slice %arg2[%c0_i32_120, %c0_i32_121] : memref<64x32xf32, #tpu.memory_space<any>> -> memref<1x32xf32, #tpu.memory_space<any>>
    %c14_i32_122 = arith.constant 14 : i32
    %c0_i32_123 = arith.constant 0 : i32
    %126 = tpu.memref_slice %arg4[%c14_i32_122, %c0_i32_123] : memref<16x32xf32, #tpu.memory_space<vmem>> -> memref<1x32xf32, #tpu.memory_space<vmem>>
    tpu.wait_dma2 semaphore(%arg5 : memref<!tpu.dma_semaphore, #tpu.memory_space<semaphore_mem>>) src(%125 : memref<1x32xf32, #tpu.memory_space<any>>) dst(%126 : memref<1x32xf32, #tpu.memory_space<vmem>>)
    %c0_i32_124 = arith.constant 0 : i32
    %c0_i32_125 = arith.constant 0 : i32
    %127 = tpu.memref_slice %arg2[%c0_i32_124, %c0_i32_125] : memref<64x32xf32, #tpu.memory_space<any>> -> memref<1x32xf32, #tpu.memory_space<any>>
    %c15_i32_126 = arith.constant 15 : i32
    %c0_i32_127 = arith.constant 0 : i32
    %128 = tpu.memref_slice %arg4[%c15_i32_126, %c0_i32_127] : memref<16x32xf32, #tpu.memory_space<vmem>> -> memref<1x32xf32, #tpu.memory_space<vmem>>
    tpu.wait_dma2 semaphore(%arg5 : memref<!tpu.dma_semaphore, #tpu.memory_space<semaphore_mem>>) src(%127 : memref<1x32xf32, #tpu.memory_space<any>>) dst(%128 : memref<1x32xf32, #tpu.memory_space<vmem>>)
    %c0 = arith.constant 0 : index
    %c0_128 = arith.constant 0 : index
    %129 = vector.load %arg4[%c0, %c0_128] : memref<16x32xf32, #tpu.memory_space<vmem>>, vector<16x32xf32>
    %cst = arith.constant 5.65685415 : f32
    %130 = vector.broadcast %cst : f32 to vector<16x32xf32>
    %131 = arith.mulf %129, %130 : vector<16x32xf32>
    %c0_129 = arith.constant 0 : index
    %c0_130 = arith.constant 0 : index
    %132 = vector.load %arg3[%c0_129, %c0_130] : memref<16x32xf32, #tpu.memory_space<vmem>>, vector<16x32xf32>
    tpu.vector_store %arg3[%c0_129, %c0_130], %131 {strides = array<i32>} : memref<16x32xf32, #tpu.memory_space<vmem>>, vector<16x32xf32>,
    return
  }
  func.func @transform_1(%arg0: i32, %arg1: memref<16xi32, #tpu.memory_space<smem>>) -> (i32, i32) {
    %c0_i32 = arith.constant 0 : i32
    %c0_i32_0 = arith.constant 0 : i32
    return %arg0, %c0_i32 : i32, i32
  }
}

</mosaic_0001>

<llo_original>
// kernel: tpu_custom_call.1
$region0: #{tpu_custom_call.1}
  #allocation0 [shape = 'u32[]', space=smem, size = 0x4, offset = 0x4, fixed_abs, tag = 'smem constant byte address 0x4 - core index']
  #allocation1 [shape = 'u32[144,128]{1,0:T(1,128)}', space=vmem, size = 0x12000, scoped, tag = 'internal scratch']
  #allocation2 [shape = 'f32[16,32]{1,0:T(8,128)}', space=vmem, size = 0x2000, scoped, tag = 'scratch operand']
  #allocation3 [shape = 's32[1]{0}', space=sflag, size = 0x4, scoped, tag = 'scratch operand']
  #allocation4 [shape = 's32[1]{0}', space=sflag, size = 0x4, scoped, tag = 'scoped memory for tpu_custom_call.1']
  #allocation5 [shape = 'u8[512]{0}', space=smem, size = 0x200, scoped, tag = 'prefetched SMEM operand 0']
  #allocation8 [shape = 's32[]', space=sflag, size = 0x4, offset = 0, fixed_abs, tag = 'sflag constant byte address 0x0 - dummy sync flag']
  #allocation9 [shape = 's32[]', space=sflag, size = 0x4, offset = 0, fixed_abs, tag = 'sflag constant byte address 0x0 - dummy sync flag']
  #allocation10 [shape = 's32[]', space=sflag, size = 0x4, offset = 0, fixed_abs, tag = 'sflag constant byte address 0x0 - dummy sync flag']
  #allocation11 [shape = 's32[]', space=sflag, size = 0x4, offset = 0, fixed_abs, tag = 'sflag constant byte address 0x0 - dummy sync flag']
  #allocation12 [shape = 's32[]', space=sflag, size = 0x4, offset = 0, fixed_abs, tag = 'sflag constant byte address 0x0 - dummy sync flag']
  #allocation13 [shape = 's32[]', space=sflag, size = 0x4, offset = 0, fixed_abs, tag = 'sflag constant byte address 0x0 - dummy sync flag']
  #allocation14 [shape = 's32[]', space=sflag, size = 0x4, offset = 0, fixed_abs, tag = 'sflag constant byte address 0x0 - dummy sync flag']
  #allocation15 [shape = 's32[]', space=sflag, size = 0x4, offset = 0, fixed_abs, tag = 'sflag constant byte address 0x0 - dummy sync flag']
  #allocation16 [shape = 's32[]', space=sflag, size = 0x4, offset = 0, fixed_abs, tag = 'sflag constant byte address 0x0 - dummy sync flag']
  #allocation17 [shape = 's32[]', space=sflag, size = 0x4, offset = 0, fixed_abs, tag = 'sflag constant byte address 0x0 - dummy sync flag']
  #allocation18 [shape = 's32[]', space=sflag, size = 0x4, offset = 0, fixed_abs, tag = 'sflag constant byte address 0x0 - dummy sync flag']
  #allocation19 [shape = 's32[]', space=sflag, size = 0x4, offset = 0, fixed_abs, tag = 'sflag constant byte address 0x0 - dummy sync flag']
  #allocation20 [shape = 's32[]', space=sflag, size = 0x4, offset = 0, fixed_abs, tag = 'sflag constant byte address 0x0 - dummy sync flag']
  #allocation21 [shape = 's32[]', space=sflag, size = 0x4, offset = 0, fixed_abs, tag = 'sflag constant byte address 0x0 - dummy sync flag']
  #allocation22 [shape = 's32[]', space=sflag, size = 0x4, offset = 0, fixed_abs, tag = 'sflag constant byte address 0x0 - dummy sync flag']
  #allocation23 [shape = 's32[]', space=sflag, size = 0x4, offset = 0, fixed_abs, tag = 'sflag constant byte address 0x0 - dummy sync flag']
  %s0 = inlined_call_operand.vmem [shape: s32[16], index: 0, kind: input, shape index: {}]
  %s1 = inlined_call_operand.vmem [shape: f32[64,32], index: 1, kind: input, shape index: {}]
  %s2 = inlined_call_operand.hbm [shape: f32[16,32], index: 2, kind: output, shape index: {}]
  %s3 = sld [smem:[#allocation0]]
  $region490: #{tpu_custom_call.1} parent=0
    _
  %s5 = ssub.s32 1, %s3
  %s6 = scalar_select 0, %s5, %s3
  %s7 = sshll.u32 %s0, 4
  %s8 = int_to_ptr.vmem [resolvable:$true] %s7
  %10 = dma.vmem_to_smem %s8, 16, [#allocation5], [#allocation4]
  %11 = dma.done [#allocation4], 16
  %12 = sfence
  $region1: #{tpu_custom_call.1} parent=0
    #allocation6 [shape = 'u8[8192]{0}', space=vmem, size = 0x2000, scoped, tag = 'output window, operand 0, single buffered']
    #allocation7 [shape = 's32[1]{0}', space=sflag, size = 0x4, scoped, tag = 'scoped memory for tpu_custom_call.1']
    %13 = vsyncpa [#allocation7], 0
    %s14 = smul.u32 0, 16
    %p15 = scmp.lt.s32.totalorder %s14, 15
    %s16 = scalar_select %p15, %s14, 15
    %s17 = sld [smem:[#allocation5 + %s16]]
    %s18 = scalar_lea.vmem %s1, %s17
    %p20 = scmp.lt.u32.totalorder 1, 8
    %p21 = pneg %p20
    // Predicated region
    $region2: #{tpu_custom_call.1} parent=1 // pred_check
      _
    $region3: #{tpu_custom_call.1} parent=1 // pred_check_branch
      %23 = sbr.rel (%p20) target = $region5
    $region4: #{tpu_custom_call.1} parent=1 // pred_region
      %s38 = sand.u32 1, 7
      %p39 = scmp.eq.s32.totalorder %s38, 0
      %p40 = pneg %p39
      // Predicated region
      $region17: #{tpu_custom_call.1} parent=4 // pred_check
        _
      $region18: #{tpu_custom_call.1} parent=4 // pred_check_branch
        %42 = sbr.rel (%p39) target = $region20
      $region19: #{tpu_custom_call.1} parent=4 // pred_region
        %s43 = sand.u32 1, 7
        %s44 = ssub.s32 1, %s43
        %s45 = scalar_lea.vmem %s18, %s44
        %s46 = ssub.s32 1, %s43
        %s47 = scalar_lea.vmem [#allocation2], %s46
        %s48 = sshllo.u32 0, %s43
        loop: start=0, step=1, limit=1
        $region21: #{tpu_custom_call.1} parent=19 // loop_pre_header
          _
        $region22: #{tpu_custom_call.1} parent=19 // loop_header
          %s50 = sphi 0, %s54
          %p51 = scmp.ge.s32.totalorder %s50, 1
          %s55 = sphi %s45, %s45
          %s56 = sphi %s47, %s47
        $region23: #{tpu_custom_call.1} parent=19 // loop_header_branch
          %53 = sbr.rel (%p51) target = $region27
        $region24: #{tpu_custom_call.1} parent=19 // loop_body
          %v57 = vld [vmem:[%s55] sm:%s48]
          %58 = vst [vmem:[%s56] sm:%s48] %v57
        $region25: #{tpu_custom_call.1} parent=19 // loop_footer
          %s54 = sadd.s32 1, %s50
        $region26: #{tpu_custom_call.1} parent=19 // loop_footer_branch
          %49 = sbr.rel target = $region22
        $region27: #{tpu_custom_call.1} parent=19 // loop_exit
          _
      $region20: #{tpu_custom_call.1} parent=4 // pred_fallthru
        _
    $region5: #{tpu_custom_call.1} parent=1 // pred_fallthru
      _
    // Predicated region
    $region6: #{tpu_custom_call.1} parent=1 // pred_check
      %p24 = pneg %p20
    $region7: #{tpu_custom_call.1} parent=1 // pred_check_branch
      %26 = sbr.rel (%p24) target = $region9
    $region8: #{tpu_custom_call.1} parent=1 // pred_region
      %s27 = sshllo.u32 0, 1
      loop: start=0, step=1, limit=1
      $region10: #{tpu_custom_call.1} parent=8 // loop_pre_header
        _
      $region11: #{tpu_custom_call.1} parent=8 // loop_header
        %s29 = sphi 0, %s33
        %p30 = scmp.ge.s32.totalorder %s29, 1
        %s34 = sphi %s18, %s18
        %s35 = sphi [#allocation2], [#allocation2]
      $region12: #{tpu_custom_call.1} parent=8 // loop_header_branch
        %32 = sbr.rel (%p30) target = $region16
      $region13: #{tpu_custom_call.1} parent=8 // loop_body
        %v36 = vld [vmem:[%s34] sm:%s27]
        %37 = vst [vmem:[%s35] sm:%s27] %v36
      $region14: #{tpu_custom_call.1} parent=8 // loop_footer
        %s33 = sadd.s32 1, %s29
      $region15: #{tpu_custom_call.1} parent=8 // loop_footer_branch
        %28 = sbr.rel target = $region11
      $region16: #{tpu_custom_call.1} parent=8 // loop_exit
        _
    $region9: #{tpu_custom_call.1} parent=1 // pred_fallthru
      _
    // Predicated region
    $region28: #{tpu_custom_call.1} parent=1 // pred_check
      _
    $region29: #{tpu_custom_call.1} parent=1 // pred_check_branch
      %61 = sbr.rel (0) target = $region31
    $region30: #{tpu_custom_call.1} parent=1 // pred_region
      %62 = vsyncadd [#allocation3], 16
    $region31: #{tpu_custom_call.1} parent=1 // pred_fallthru
      _
    %s63 = sadd.s32 %s14, 1
    %p64 = scmp.lt.s32.totalorder %s63, 15
    %s65 = scalar_select %p64, %s63, 15
    %s66 = sld [smem:[#allocation5 + %s65]]
    %s67 = scalar_lea.vmem %s1, %s66
    %s68 = scalar_lea.vmem [#allocation2], 1
    %p70 = scmp.lt.u32.totalorder 1, 8
    %p71 = pneg %p70
    // Predicated region
    $region32: #{tpu_custom_call.1} parent=1 // pred_check
      _
    $region33: #{tpu_custom_call.1} parent=1 // pred_check_branch
      %73 = sbr.rel (%p70) target = $region35
    $region34: #{tpu_custom_call.1} parent=1 // pred_region
      %s88 = sand.u32 1, 7
      %p89 = scmp.eq.s32.totalorder %s88, 0
      %p90 = pneg %p89
      // Predicated region
      $region47: #{tpu_custom_call.1} parent=34 // pred_check
        _
      $region48: #{tpu_custom_call.1} parent=34 // pred_check_branch
        %92 = sbr.rel (%p89) target = $region50
      $region49: #{tpu_custom_call.1} parent=34 // pred_region
        %s93 = sand.u32 1, 7
        %s94 = ssub.s32 1, %s93
        %s95 = scalar_lea.vmem %s67, %s94
        %s96 = ssub.s32 1, %s93
        %s97 = scalar_lea.vmem %s68, %s96 [#allocation2]
        %s98 = sshllo.u32 0, %s93
        loop: start=0, step=1, limit=1
        $region51: #{tpu_custom_call.1} parent=49 // loop_pre_header
          _
        $region52: #{tpu_custom_call.1} parent=49 // loop_header
          %s100 = sphi 0, %s104
          %p101 = scmp.ge.s32.totalorder %s100, 1
          %s105 = sphi %s95, %s95
          %s106 = sphi %s97, %s97
        $region53: #{tpu_custom_call.1} parent=49 // loop_header_branch
          %103 = sbr.rel (%p101) target = $region57
        $region54: #{tpu_custom_call.1} parent=49 // loop_body
          %v107 = vld [vmem:[%s105] sm:%s98]
          %108 = vst [vmem:[%s106] sm:%s98] %v107
        $region55: #{tpu_custom_call.1} parent=49 // loop_footer
          %s104 = sadd.s32 1, %s100
        $region56: #{tpu_custom_call.1} parent=49 // loop_footer_branch
          %99 = sbr.rel target = $region52
        $region57: #{tpu_custom_call.1} parent=49 // loop_exit
          _
      $region50: #{tpu_custom_call.1} parent=34 // pred_fallthru
        _
    $region35: #{tpu_custom_call.1} parent=1 // pred_fallthru
      _
    // Predicated region
    $region36: #{tpu_custom_call.1} parent=1 // pred_check
      %p74 = pneg %p70
    $region37: #{tpu_custom_call.1} parent=1 // pred_check_branch
      %76 = sbr.rel (%p74) target = $region39
    $region38: #{tpu_custom_call.1} parent=1 // pred_region
      %s77 = sshllo.u32 0, 1
      loop: start=0, step=1, limit=1
      $region40: #{tpu_custom_call.1} parent=38 // loop_pre_header
        _
      $region41: #{tpu_custom_call.1} parent=38 // loop_header
        %s79 = sphi 0, %s83
        %p80 = scmp.ge.s32.totalorder %s79, 1
        %s84 = sphi %s67, %s67
        %s85 = sphi %s68, %s68
      $region42: #{tpu_custom_call.1} parent=38 // loop_header_branch
        %82 = sbr.rel (%p80) target = $region46
      $region43: #{tpu_custom_call.1} parent=38 // loop_body
        %v86 = vld [vmem:[%s84] sm:%s77]
        %87 = vst [vmem:[%s85] sm:%s77] %v86
      $region44: #{tpu_custom_call.1} parent=38 // loop_footer
        %s83 = sadd.s32 1, %s79
      $region45: #{tpu_custom_call.1} parent=38 // loop_footer_branch
        %78 = sbr.rel target = $region41
      $region46: #{tpu_custom_call.1} parent=38 // loop_exit
        _
    $region39: #{tpu_custom_call.1} parent=1 // pred_fallthru
      _
    // Predicated region
    $region58: #{tpu_custom_call.1} parent=1 // pred_check
      _
    $region59: #{tpu_custom_call.1} parent=1 // pred_check_branch
      %111 = sbr.rel (0) target = $region61
    $region60: #{tpu_custom_call.1} parent=1 // pred_region
      %112 = vsyncadd [#allocation3], 16
    $region61: #{tpu_custom_call.1} parent=1 // pred_fallthru
      _
    %s113 = sadd.s32 %s14, 2
    %p114 = scmp.lt.s32.totalorder %s113, 15
    %s115 = scalar_select %p114, %s113, 15
    %s116 = sld [smem:[#allocation5 + %s115]]
    %s117 = scalar_lea.vmem %s1, %s116
    %s118 = scalar_lea.vmem [#allocation2], 2
    %p120 = scmp.lt.u32.totalorder 1, 8
    %p121 = pneg %p120
    // Predicated region
    $region62: #{tpu_custom_call.1} parent=1 // pred_check
      _
    $region63: #{tpu_custom_call.1} parent=1 // pred_check_branch
      %123 = sbr.rel (%p120) target = $region65
    $region64: #{tpu_custom_call.1} parent=1 // pred_region
      %s138 = sand.u32 1, 7
      %p139 = scmp.eq.s32.totalorder %s138, 0
      %p140 = pneg %p139
      // Predicated region
      $region77: #{tpu_custom_call.1} parent=64 // pred_check
        _
      $region78: #{tpu_custom_call.1} parent=64 // pred_check_branch
        %142 = sbr.rel (%p139) target = $region80
      $region79: #{tpu_custom_call.1} parent=64 // pred_region
        %s143 = sand.u32 1, 7
        %s144 = ssub.s32 1, %s143
        %s145 = scalar_lea.vmem %s117, %s144
        %s146 = ssub.s32 1, %s143
        %s147 = scalar_lea.vmem %s118, %s146 [#allocation2]
        %s148 = sshllo.u32 0, %s143
        loop: start=0, step=1, limit=1
        $region81: #{tpu_custom_call.1} parent=79 // loop_pre_header
          _
        $region82: #{tpu_custom_call.1} parent=79 // loop_header
          %s150 = sphi 0, %s154
          %p151 = scmp.ge.s32.totalorder %s150, 1
          %s155 = sphi %s145, %s145
          %s156 = sphi %s147, %s147
        $region83: #{tpu_custom_call.1} parent=79 // loop_header_branch
          %153 = sbr.rel (%p151) target = $region87
        $region84: #{tpu_custom_call.1} parent=79 // loop_body
          %v157 = vld [vmem:[%s155] sm:%s148]
          %158 = vst [vmem:[%s156] sm:%s148] %v157
        $region85: #{tpu_custom_call.1} parent=79 // loop_footer
          %s154 = sadd.s32 1, %s150
        $region86: #{tpu_custom_call.1} parent=79 // loop_footer_branch
          %149 = sbr.rel target = $region82
        $region87: #{tpu_custom_call.1} parent=79 // loop_exit
          _
      $region80: #{tpu_custom_call.1} parent=64 // pred_fallthru
        _
    $region65: #{tpu_custom_call.1} parent=1 // pred_fallthru
      _
    // Predicated region
    $region66: #{tpu_custom_call.1} parent=1 // pred_check
      %p124 = pneg %p120
    $region67: #{tpu_custom_call.1} parent=1 // pred_check_branch
      %126 = sbr.rel (%p124) target = $region69
    $region68: #{tpu_custom_call.1} parent=1 // pred_region
      %s127 = sshllo.u32 0, 1
      loop: start=0, step=1, limit=1
      $region70: #{tpu_custom_call.1} parent=68 // loop_pre_header
        _
      $region71: #{tpu_custom_call.1} parent=68 // loop_header
        %s129 = sphi 0, %s133
        %p130 = scmp.ge.s32.totalorder %s129, 1
        %s134 = sphi %s117, %s117
        %s135 = sphi %s118, %s118
      $region72: #{tpu_custom_call.1} parent=68 // loop_header_branch
        %132 = sbr.rel (%p130) target = $region76
      $region73: #{tpu_custom_call.1} parent=68 // loop_body
        %v136 = vld [vmem:[%s134] sm:%s127]
        %137 = vst [vmem:[%s135] sm:%s127] %v136
      $region74: #{tpu_custom_call.1} parent=68 // loop_footer
        %s133 = sadd.s32 1, %s129
      $region75: #{tpu_custom_call.1} parent=68 // loop_footer_branch
        %128 = sbr.rel target = $region71
      $region76: #{tpu_custom_call.1} parent=68 // loop_exit
        _
    $region69: #{tpu_custom_call.1} parent=1 // pred_fallthru
      _
    // Predicated region
    $region88: #{tpu_custom_call.1} parent=1 // pred_check
      _
    $region89: #{tpu_custom_call.1} parent=1 // pred_check_branch
      %161 = sbr.rel (0) target = $region91
    $region90: #{tpu_custom_call.1} parent=1 // pred_region
      %162 = vsyncadd [#allocation3], 16
    $region91: #{tpu_custom_call.1} parent=1 // pred_fallthru
      _
    %s163 = sadd.s32 %s14, 3
    %p164 = scmp.lt.s32.totalorder %s163, 15
    %s165 = scalar_select %p164, %s163, 15
    %s166 = sld [smem:[#allocation5 + %s165]]
    %s167 = scalar_lea.vmem %s1, %s166
    %s168 = scalar_lea.vmem [#allocation2], 3
    %p170 = scmp.lt.u32.totalorder 1, 8
    %p171 = pneg %p170
    // Predicated region
    $region92: #{tpu_custom_call.1} parent=1 // pred_check
      _
    $region93: #{tpu_custom_call.1} parent=1 // pred_check_branch
      %173 = sbr.rel (%p170) target = $region95
    $region94: #{tpu_custom_call.1} parent=1 // pred_region
      %s188 = sand.u32 1, 7
      %p189 = scmp.eq.s32.totalorder %s188, 0
      %p190 = pneg %p189
      // Predicated region
      $region107: #{tpu_custom_call.1} parent=94 // pred_check
        _
      $region108: #{tpu_custom_call.1} parent=94 // pred_check_branch
        %192 = sbr.rel (%p189) target = $region110
      $region109: #{tpu_custom_call.1} parent=94 // pred_region
        %s193 = sand.u32 1, 7
        %s194 = ssub.s32 1, %s193
        %s195 = scalar_lea.vmem %s167, %s194
        %s196 = ssub.s32 1, %s193
        %s197 = scalar_lea.vmem %s168, %s196 [#allocation2]
        %s198 = sshllo.u32 0, %s193
        loop: start=0, step=1, limit=1
        $region111: #{tpu_custom_call.1} parent=109 // loop_pre_header
          _
        $region112: #{tpu_custom_call.1} parent=109 // loop_header
          %s200 = sphi 0, %s204
          %p201 = scmp.ge.s32.totalorder %s200, 1
          %s205 = sphi %s195, %s195
          %s206 = sphi %s197, %s197
        $region113: #{tpu_custom_call.1} parent=109 // loop_header_branch
          %203 = sbr.rel (%p201) target = $region117
        $region114: #{tpu_custom_call.1} parent=109 // loop_body
          %v207 = vld [vmem:[%s205] sm:%s198]
          %208 = vst [vmem:[%s206] sm:%s198] %v207
        $region115: #{tpu_custom_call.1} parent=109 // loop_footer
          %s204 = sadd.s32 1, %s200
        $region116: #{tpu_custom_call.1} parent=109 // loop_footer_branch
          %199 = sbr.rel target = $region112
        $region117: #{tpu_custom_call.1} parent=109 // loop_exit
          _
      $region110: #{tpu_custom_call.1} parent=94 // pred_fallthru
        _
    $region95: #{tpu_custom_call.1} parent=1 // pred_fallthru
      _
    // Predicated region
    $region96: #{tpu_custom_call.1} parent=1 // pred_check
      %p174 = pneg %p170
    $region97: #{tpu_custom_call.1} parent=1 // pred_check_branch
      %176 = sbr.rel (%p174) target = $region99
    $region98: #{tpu_custom_call.1} parent=1 // pred_region
      %s177 = sshllo.u32 0, 1
      loop: start=0, step=1, limit=1
      $region100: #{tpu_custom_call.1} parent=98 // loop_pre_header
        _
      $region101: #{tpu_custom_call.1} parent=98 // loop_header
        %s179 = sphi 0, %s183
        %p180 = scmp.ge.s32.totalorder %s179, 1
        %s184 = sphi %s167, %s167
        %s185 = sphi %s168, %s168
      $region102: #{tpu_custom_call.1} parent=98 // loop_header_branch
        %182 = sbr.rel (%p180) target = $region106
      $region103: #{tpu_custom_call.1} parent=98 // loop_body
        %v186 = vld [vmem:[%s184] sm:%s177]
        %187 = vst [vmem:[%s185] sm:%s177] %v186
      $region104: #{tpu_custom_call.1} parent=98 // loop_footer
        %s183 = sadd.s32 1, %s179
      $region105: #{tpu_custom_call.1} parent=98 // loop_footer_branch
        %178 = sbr.rel target = $region101
      $region106: #{tpu_custom_call.1} parent=98 // loop_exit
        _
    $region99: #{tpu_custom_call.1} parent=1 // pred_fallthru
      _
    // Predicated region
    $region118: #{tpu_custom_call.1} parent=1 // pred_check
      _
    $region119: #{tpu_custom_call.1} parent=1 // pred_check_branch
      %211 = sbr.rel (0) target = $region121
    $region120: #{tpu_custom_call.1} parent=1 // pred_region
      %212 = vsyncadd [#allocation3], 16
    $region121: #{tpu_custom_call.1} parent=1 // pred_fallthru
      _
    %s213 = sadd.s32 %s14, 4
    %p214 = scmp.lt.s32.totalorder %s213, 15
    %s215 = scalar_select %p214, %s213, 15
    %s216 = sld [smem:[#allocation5 + %s215]]
    %s217 = scalar_lea.vmem %s1, %s216
    %s218 = scalar_lea.vmem [#allocation2], 4
    %p220 = scmp.lt.u32.totalorder 1, 8
    %p221 = pneg %p220
    // Predicated region
    $region122: #{tpu_custom_call.1} parent=1 // pred_check
      _
    $region123: #{tpu_custom_call.1} parent=1 // pred_check_branch
      %223 = sbr.rel (%p220) target = $region125
    $region124: #{tpu_custom_call.1} parent=1 // pred_region
      %s238 = sand.u32 1, 7
      %p239 = scmp.eq.s32.totalorder %s238, 0
      %p240 = pneg %p239
      // Predicated region
      $region137: #{tpu_custom_call.1} parent=124 // pred_check
        _
      $region138: #{tpu_custom_call.1} parent=124 // pred_check_branch
        %242 = sbr.rel (%p239) target = $region140
      $region139: #{tpu_custom_call.1} parent=124 // pred_region
        %s243 = sand.u32 1, 7
        %s244 = ssub.s32 1, %s243
        %s245 = scalar_lea.vmem %s217, %s244
        %s246 = ssub.s32 1, %s243
        %s247 = scalar_lea.vmem %s218, %s246 [#allocation2]
        %s248 = sshllo.u32 0, %s243
        loop: start=0, step=1, limit=1
        $region141: #{tpu_custom_call.1} parent=139 // loop_pre_header
          _
        $region142: #{tpu_custom_call.1} parent=139 // loop_header
          %s250 = sphi 0, %s254
          %p251 = scmp.ge.s32.totalorder %s250, 1
          %s255 = sphi %s245, %s245
          %s256 = sphi %s247, %s247
        $region143: #{tpu_custom_call.1} parent=139 // loop_header_branch
          %253 = sbr.rel (%p251) target = $region147
        $region144: #{tpu_custom_call.1} parent=139 // loop_body
          %v257 = vld [vmem:[%s255] sm:%s248]
          %258 = vst [vmem:[%s256] sm:%s248] %v257
        $region145: #{tpu_custom_call.1} parent=139 // loop_footer
          %s254 = sadd.s32 1, %s250
        $region146: #{tpu_custom_call.1} parent=139 // loop_footer_branch
          %249 = sbr.rel target = $region142
        $region147: #{tpu_custom_call.1} parent=139 // loop_exit
          _
      $region140: #{tpu_custom_call.1} parent=124 // pred_fallthru
        _
    $region125: #{tpu_custom_call.1} parent=1 // pred_fallthru
      _
    // Predicated region
    $region126: #{tpu_custom_call.1} parent=1 // pred_check
      %p224 = pneg %p220
    $region127: #{tpu_custom_call.1} parent=1 // pred_check_branch
      %226 = sbr.rel (%p224) target = $region129
    $region128: #{tpu_custom_call.1} parent=1 // pred_region
      %s227 = sshllo.u32 0, 1
      loop: start=0, step=1, limit=1
      $region130: #{tpu_custom_call.1} parent=128 // loop_pre_header
        _
      $region131: #{tpu_custom_call.1} parent=128 // loop_header
        %s229 = sphi 0, %s233
        %p230 = scmp.ge.s32.totalorder %s229, 1
        %s234 = sphi %s217, %s217
        %s235 = sphi %s218, %s218
      $region132: #{tpu_custom_call.1} parent=128 // loop_header_branch
        %232 = sbr.rel (%p230) target = $region136
      $region133: #{tpu_custom_call.1} parent=128 // loop_body
        %v236 = vld [vmem:[%s234] sm:%s227]
        %237 = vst [vmem:[%s235] sm:%s227] %v236
      $region134: #{tpu_custom_call.1} parent=128 // loop_footer
        %s233 = sadd.s32 1, %s229
      $region135: #{tpu_custom_call.1} parent=128 // loop_footer_branch
        %228 = sbr.rel target = $region131
      $region136: #{tpu_custom_call.1} parent=128 // loop_exit
        _
    $region129: #{tpu_custom_call.1} parent=1 // pred_fallthru
      _
    // Predicated region
    $region148: #{tpu_custom_call.1} parent=1 // pred_check
      _
    $region149: #{tpu_custom_call.1} parent=1 // pred_check_branch
      %261 = sbr.rel (0) target = $region151
    $region150: #{tpu_custom_call.1} parent=1 // pred_region
      %262 = vsyncadd [#allocation3], 16
    $region151: #{tpu_custom_call.1} parent=1 // pred_fallthru
      _
    %s263 = sadd.s32 %s14, 5
    %p264 = scmp.lt.s32.totalorder %s263, 15
    %s265 = scalar_select %p264, %s263, 15
    %s266 = sld [smem:[#allocation5 + %s265]]
    %s267 = scalar_lea.vmem %s1, %s266
    %s268 = scalar_lea.vmem [#allocation2], 5
    %p270 = scmp.lt.u32.totalorder 1, 8
    %p271 = pneg %p270
    // Predicated region
    $region152: #{tpu_custom_call.1} parent=1 // pred_check
      _
    $region153: #{tpu_custom_call.1} parent=1 // pred_check_branch
      %273 = sbr.rel (%p270) target = $region155
    $region154: #{tpu_custom_call.1} parent=1 // pred_region
      %s288 = sand.u32 1, 7
      %p289 = scmp.eq.s32.totalorder %s288, 0
      %p290 = pneg %p289
      // Predicated region
      $region167: #{tpu_custom_call.1} parent=154 // pred_check
        _
      $region168: #{tpu_custom_call.1} parent=154 // pred_check_branch
        %292 = sbr.rel (%p289) target = $region170
      $region169: #{tpu_custom_call.1} parent=154 // pred_region
        %s293 = sand.u32 1, 7
        %s294 = ssub.s32 1, %s293
        %s295 = scalar_lea.vmem %s267, %s294
        %s296 = ssub.s32 1, %s293
        %s297 = scalar_lea.vmem %s268, %s296 [#allocation2]
        %s298 = sshllo.u32 0, %s293
        loop: start=0, step=1, limit=1
        $region171: #{tpu_custom_call.1} parent=169 // loop_pre_header
          _
        $region172: #{tpu_custom_call.1} parent=169 // loop_header
          %s300 = sphi 0, %s304
          %p301 = scmp.ge.s32.totalorder %s300, 1
          %s305 = sphi %s295, %s295
          %s306 = sphi %s297, %s297
        $region173: #{tpu_custom_call.1} parent=169 // loop_header_branch
          %303 = sbr.rel (%p301) target = $region177
        $region174: #{tpu_custom_call.1} parent=169 // loop_body
          %v307 = vld [vmem:[%s305] sm:%s298]
          %308 = vst [vmem:[%s306] sm:%s298] %v307
        $region175: #{tpu_custom_call.1} parent=169 // loop_footer
          %s304 = sadd.s32 1, %s300
        $region176: #{tpu_custom_call.1} parent=169 // loop_footer_branch
          %299 = sbr.rel target = $region172
        $region177: #{tpu_custom_call.1} parent=169 // loop_exit
          _
      $region170: #{tpu_custom_call.1} parent=154 // pred_fallthru
        _
    $region155: #{tpu_custom_call.1} parent=1 // pred_fallthru
      _
    // Predicated region
    $region156: #{tpu_custom_call.1} parent=1 // pred_check
      %p274 = pneg %p270
    $region157: #{tpu_custom_call.1} parent=1 // pred_check_branch
      %276 = sbr.rel (%p274) target = $region159
    $region158: #{tpu_custom_call.1} parent=1 // pred_region
      %s277 = sshllo.u32 0, 1
      loop: start=0, step=1, limit=1
      $region160: #{tpu_custom_call.1} parent=158 // loop_pre_header
        _
      $region161: #{tpu_custom_call.1} parent=158 // loop_header
        %s279 = sphi 0, %s283
        %p280 = scmp.ge.s32.totalorder %s279, 1
        %s284 = sphi %s267, %s267
        %s285 = sphi %s268, %s268
      $region162: #{tpu_custom_call.1} parent=158 // loop_header_branch
        %282 = sbr.rel (%p280) target = $region166
      $region163: #{tpu_custom_call.1} parent=158 // loop_body
        %v286 = vld [vmem:[%s284] sm:%s277]
        %287 = vst [vmem:[%s285] sm:%s277] %v286
      $region164: #{tpu_custom_call.1} parent=158 // loop_footer
        %s283 = sadd.s32 1, %s279
      $region165: #{tpu_custom_call.1} parent=158 // loop_footer_branch
        %278 = sbr.rel target = $region161
      $region166: #{tpu_custom_call.1} parent=158 // loop_exit
        _
    $region159: #{tpu_custom_call.1} parent=1 // pred_fallthru
      _
    // Predicated region
    $region178: #{tpu_custom_call.1} parent=1 // pred_check
      _
    $region179: #{tpu_custom_call.1} parent=1 // pred_check_branch
      %311 = sbr.rel (0) target = $region181
    $region180: #{tpu_custom_call.1} parent=1 // pred_region
      %312 = vsyncadd [#allocation3], 16
    $region181: #{tpu_custom_call.1} parent=1 // pred_fallthru
      _
    %s313 = sadd.s32 %s14, 6
    %p314 = scmp.lt.s32.totalorder %s313, 15
    %s315 = scalar_select %p314, %s313, 15
    %s316 = sld [smem:[#allocation5 + %s315]]
    %s317 = scalar_lea.vmem %s1, %s316
    %s318 = scalar_lea.vmem [#allocation2], 6
    %p320 = scmp.lt.u32.totalorder 1, 8
    %p321 = pneg %p320
    // Predicated region
    $region182: #{tpu_custom_call.1} parent=1 // pred_check
      _
    $region183: #{tpu_custom_call.1} parent=1 // pred_check_branch
      %323 = sbr.rel (%p320) target = $region185
    $region184: #{tpu_custom_call.1} parent=1 // pred_region
      %s338 = sand.u32 1, 7
      %p339 = scmp.eq.s32.totalorder %s338, 0
      %p340 = pneg %p339
      // Predicated region
      $region197: #{tpu_custom_call.1} parent=184 // pred_check
        _
      $region198: #{tpu_custom_call.1} parent=184 // pred_check_branch
        %342 = sbr.rel (%p339) target = $region200
      $region199: #{tpu_custom_call.1} parent=184 // pred_region
        %s343 = sand.u32 1, 7
        %s344 = ssub.s32 1, %s343
        %s345 = scalar_lea.vmem %s317, %s344
        %s346 = ssub.s32 1, %s343
        %s347 = scalar_lea.vmem %s318, %s346 [#allocation2]
        %s348 = sshllo.u32 0, %s343
        loop: start=0, step=1, limit=1
        $region201: #{tpu_custom_call.1} parent=199 // loop_pre_header
          _
        $region202: #{tpu_custom_call.1} parent=199 // loop_header
          %s350 = sphi 0, %s354
          %p351 = scmp.ge.s32.totalorder %s350, 1
          %s355 = sphi %s345, %s345
          %s356 = sphi %s347, %s347
        $region203: #{tpu_custom_call.1} parent=199 // loop_header_branch
          %353 = sbr.rel (%p351) target = $region207
        $region204: #{tpu_custom_call.1} parent=199 // loop_body
          %v357 = vld [vmem:[%s355] sm:%s348]
          %358 = vst [vmem:[%s356] sm:%s348] %v357
        $region205: #{tpu_custom_call.1} parent=199 // loop_footer
          %s354 = sadd.s32 1, %s350
        $region206: #{tpu_custom_call.1} parent=199 // loop_footer_branch
          %349 = sbr.rel target = $region202
        $region207: #{tpu_custom_call.1} parent=199 // loop_exit
          _
      $region200: #{tpu_custom_call.1} parent=184 // pred_fallthru
        _
    $region185: #{tpu_custom_call.1} parent=1 // pred_fallthru
      _
    // Predicated region
    $region186: #{tpu_custom_call.1} parent=1 // pred_check
      %p324 = pneg %p320
    $region187: #{tpu_custom_call.1} parent=1 // pred_check_branch
      %326 = sbr.rel (%p324) target = $region189
    $region188: #{tpu_custom_call.1} parent=1 // pred_region
      %s327 = sshllo.u32 0, 1
      loop: start=0, step=1, limit=1
      $region190: #{tpu_custom_call.1} parent=188 // loop_pre_header
        _
      $region191: #{tpu_custom_call.1} parent=188 // loop_header
        %s329 = sphi 0, %s333
        %p330 = scmp.ge.s32.totalorder %s329, 1
        %s334 = sphi %s317, %s317
        %s335 = sphi %s318, %s318
      $region192: #{tpu_custom_call.1} parent=188 // loop_header_branch
        %332 = sbr.rel (%p330) target = $region196
      $region193: #{tpu_custom_call.1} parent=188 // loop_body
        %v336 = vld [vmem:[%s334] sm:%s327]
        %337 = vst [vmem:[%s335] sm:%s327] %v336
      $region194: #{tpu_custom_call.1} parent=188 // loop_footer
        %s333 = sadd.s32 1, %s329
      $region195: #{tpu_custom_call.1} parent=188 // loop_footer_branch
        %328 = sbr.rel target = $region191
      $region196: #{tpu_custom_call.1} parent=188 // loop_exit
        _
    $region189: #{tpu_custom_call.1} parent=1 // pred_fallthru
      _
    // Predicated region
    $region208: #{tpu_custom_call.1} parent=1 // pred_check
      _
    $region209: #{tpu_custom_call.1} parent=1 // pred_check_branch
      %361 = sbr.rel (0) target = $region211
    $region210: #{tpu_custom_call.1} parent=1 // pred_region
      %362 = vsyncadd [#allocation3], 16
    $region211: #{tpu_custom_call.1} parent=1 // pred_fallthru
      _
    %s363 = sadd.s32 %s14, 7
    %p364 = scmp.lt.s32.totalorder %s363, 15
    %s365 = scalar_select %p364, %s363, 15
    %s366 = sld [smem:[#allocation5 + %s365]]
    %s367 = scalar_lea.vmem %s1, %s366
    %s368 = scalar_lea.vmem [#allocation2], 7
    %p370 = scmp.lt.u32.totalorder 1, 8
    %p371 = pneg %p370
    // Predicated region
    $region212: #{tpu_custom_call.1} parent=1 // pred_check
      _
    $region213: #{tpu_custom_call.1} parent=1 // pred_check_branch
      %373 = sbr.rel (%p370) target = $region215
    $region214: #{tpu_custom_call.1} parent=1 // pred_region
      %s388 = sand.u32 1, 7
      %p389 = scmp.eq.s32.totalorder %s388, 0
      %p390 = pneg %p389
      // Predicated region
      $region227: #{tpu_custom_call.1} parent=214 // pred_check
        _
      $region228: #{tpu_custom_call.1} parent=214 // pred_check_branch
        %392 = sbr.rel (%p389) target = $region230
      $region229: #{tpu_custom_call.1} parent=214 // pred_region
        %s393 = sand.u32 1, 7
        %s394 = ssub.s32 1, %s393
        %s395 = scalar_lea.vmem %s367, %s394
        %s396 = ssub.s32 1, %s393
        %s397 = scalar_lea.vmem %s368, %s396 [#allocation2]
        %s398 = sshllo.u32 0, %s393
        loop: start=0, step=1, limit=1
        $region231: #{tpu_custom_call.1} parent=229 // loop_pre_header
          _
        $region232: #{tpu_custom_call.1} parent=229 // loop_header
          %s400 = sphi 0, %s404
          %p401 = scmp.ge.s32.totalorder %s400, 1
          %s405 = sphi %s395, %s395
          %s406 = sphi %s397, %s397
        $region233: #{tpu_custom_call.1} parent=229 // loop_header_branch
          %403 = sbr.rel (%p401) target = $region237
        $region234: #{tpu_custom_call.1} parent=229 // loop_body
          %v407 = vld [vmem:[%s405] sm:%s398]
          %408 = vst [vmem:[%s406] sm:%s398] %v407
        $region235: #{tpu_custom_call.1} parent=229 // loop_footer
          %s404 = sadd.s32 1, %s400
        $region236: #{tpu_custom_call.1} parent=229 // loop_footer_branch
          %399 = sbr.rel target = $region232
        $region237: #{tpu_custom_call.1} parent=229 // loop_exit
          _
      $region230: #{tpu_custom_call.1} parent=214 // pred_fallthru
        _
    $region215: #{tpu_custom_call.1} parent=1 // pred_fallthru
      _
    // Predicated region
    $region216: #{tpu_custom_call.1} parent=1 // pred_check
      %p374 = pneg %p370
    $region217: #{tpu_custom_call.1} parent=1 // pred_check_branch
      %376 = sbr.rel (%p374) target = $region219
    $region218: #{tpu_custom_call.1} parent=1 // pred_region
      %s377 = sshllo.u32 0, 1
      loop: start=0, step=1, limit=1
      $region220: #{tpu_custom_call.1} parent=218 // loop_pre_header
        _
      $region221: #{tpu_custom_call.1} parent=218 // loop_header
        %s379 = sphi 0, %s383
        %p380 = scmp.ge.s32.totalorder %s379, 1
        %s384 = sphi %s367, %s367
        %s385 = sphi %s368, %s368
      $region222: #{tpu_custom_call.1} parent=218 // loop_header_branch
        %382 = sbr.rel (%p380) target = $region226
      $region223: #{tpu_custom_call.1} parent=218 // loop_body
        %v386 = vld [vmem:[%s384] sm:%s377]
        %387 = vst [vmem:[%s385] sm:%s377] %v386
      $region224: #{tpu_custom_call.1} parent=218 // loop_footer
        %s383 = sadd.s32 1, %s379
      $region225: #{tpu_custom_call.1} parent=218 // loop_footer_branch
        %378 = sbr.rel target = $region221
      $region226: #{tpu_custom_call.1} parent=218 // loop_exit
        _
    $region219: #{tpu_custom_call.1} parent=1 // pred_fallthru
      _
    // Predicated region
    $region238: #{tpu_custom_call.1} parent=1 // pred_check
      _
    $region239: #{tpu_custom_call.1} parent=1 // pred_check_branch
      %411 = sbr.rel (0) target = $region241
    $region240: #{tpu_custom_call.1} parent=1 // pred_region
      %412 = vsyncadd [#allocation3], 16
    $region241: #{tpu_custom_call.1} parent=1 // pred_fallthru
      _
    %s413 = sadd.s32 %s14, 8
    %p414 = scmp.lt.s32.totalorder %s413, 15
    %s415 = scalar_select %p414, %s413, 15
    %s416 = sld [smem:[#allocation5 + %s415]]
    %s417 = scalar_lea.vmem %s1, %s416
    %s418 = scalar_lea.vmem [#allocation2], 8
    %p420 = scmp.lt.u32.totalorder 1, 8
    %p421 = pneg %p420
    // Predicated region
    $region242: #{tpu_custom_call.1} parent=1 // pred_check
      _
    $region243: #{tpu_custom_call.1} parent=1 // pred_check_branch
      %423 = sbr.rel (%p420) target = $region245
    $region244: #{tpu_custom_call.1} parent=1 // pred_region
      %s438 = sand.u32 1, 7
      %p439 = scmp.eq.s32.totalorder %s438, 0
      %p440 = pneg %p439
      // Predicated region
      $region257: #{tpu_custom_call.1} parent=244 // pred_check
        _
      $region258: #{tpu_custom_call.1} parent=244 // pred_check_branch
        %442 = sbr.rel (%p439) target = $region260
      $region259: #{tpu_custom_call.1} parent=244 // pred_region
        %s443 = sand.u32 1, 7
        %s444 = ssub.s32 1, %s443
        %s445 = scalar_lea.vmem %s417, %s444
        %s446 = ssub.s32 1, %s443
        %s447 = scalar_lea.vmem %s418, %s446 [#allocation2]
        %s448 = sshllo.u32 0, %s443
        loop: start=0, step=1, limit=1
        $region261: #{tpu_custom_call.1} parent=259 // loop_pre_header
          _
        $region262: #{tpu_custom_call.1} parent=259 // loop_header
          %s450 = sphi 0, %s454
          %p451 = scmp.ge.s32.totalorder %s450, 1
          %s455 = sphi %s445, %s445
          %s456 = sphi %s447, %s447
        $region263: #{tpu_custom_call.1} parent=259 // loop_header_branch
          %453 = sbr.rel (%p451) target = $region267
        $region264: #{tpu_custom_call.1} parent=259 // loop_body
          %v457 = vld [vmem:[%s455] sm:%s448]
          %458 = vst [vmem:[%s456] sm:%s448] %v457
        $region265: #{tpu_custom_call.1} parent=259 // loop_footer
          %s454 = sadd.s32 1, %s450
        $region266: #{tpu_custom_call.1} parent=259 // loop_footer_branch
          %449 = sbr.rel target = $region262
        $region267: #{tpu_custom_call.1} parent=259 // loop_exit
          _
      $region260: #{tpu_custom_call.1} parent=244 // pred_fallthru
        _
    $region245: #{tpu_custom_call.1} parent=1 // pred_fallthru
      _
    // Predicated region
    $region246: #{tpu_custom_call.1} parent=1 // pred_check
      %p424 = pneg %p420
    $region247: #{tpu_custom_call.1} parent=1 // pred_check_branch
      %426 = sbr.rel (%p424) target = $region249
    $region248: #{tpu_custom_call.1} parent=1 // pred_region
      %s427 = sshllo.u32 0, 1
      loop: start=0, step=1, limit=1
      $region250: #{tpu_custom_call.1} parent=248 // loop_pre_header
        _
      $region251: #{tpu_custom_call.1} parent=248 // loop_header
        %s429 = sphi 0, %s433
        %p430 = scmp.ge.s32.totalorder %s429, 1
        %s434 = sphi %s417, %s417
        %s435 = sphi %s418, %s418
      $region252: #{tpu_custom_call.1} parent=248 // loop_header_branch
        %432 = sbr.rel (%p430) target = $region256
      $region253: #{tpu_custom_call.1} parent=248 // loop_body
        %v436 = vld [vmem:[%s434] sm:%s427]
        %437 = vst [vmem:[%s435] sm:%s427] %v436
      $region254: #{tpu_custom_call.1} parent=248 // loop_footer
        %s433 = sadd.s32 1, %s429
      $region255: #{tpu_custom_call.1} parent=248 // loop_footer_branch
        %428 = sbr.rel target = $region251
      $region256: #{tpu_custom_call.1} parent=248 // loop_exit
        _
    $region249: #{tpu_custom_call.1} parent=1 // pred_fallthru
      _
    // Predicated region
    $region268: #{tpu_custom_call.1} parent=1 // pred_check
      _
    $region269: #{tpu_custom_call.1} parent=1 // pred_check_branch
      %461 = sbr.rel (0) target = $region271
    $region270: #{tpu_custom_call.1} parent=1 // pred_region
      %462 = vsyncadd [#allocation3], 16
    $region271: #{tpu_custom_call.1} parent=1 // pred_fallthru
      _
    %s463 = sadd.s32 %s14, 9
    %p464 = scmp.lt.s32.totalorder %s463, 15
    %s465 = scalar_select %p464, %s463, 15
    %s466 = sld [smem:[#allocation5 + %s465]]
    %s467 = scalar_lea.vmem %s1, %s466
    %s468 = scalar_lea.vmem [#allocation2], 9
    %p470 = scmp.lt.u32.totalorder 1, 8
    %p471 = pneg %p470
    // Predicated region
    $region272: #{tpu_custom_call.1} parent=1 // pred_check
      _
    $region273: #{tpu_custom_call.1} parent=1 // pred_check_branch
      %473 = sbr.rel (%p470) target = $region275
    $region274: #{tpu_custom_call.1} parent=1 // pred_region
      %s488 = sand.u32 1, 7
      %p489 = scmp.eq.s32.totalorder %s488, 0
      %p490 = pneg %p489
      // Predicated region
      $region287: #{tpu_custom_call.1} parent=274 // pred_check
        _
      $region288: #{tpu_custom_call.1} parent=274 // pred_check_branch
        %492 = sbr.rel (%p489) target = $region290
      $region289: #{tpu_custom_call.1} parent=274 // pred_region
        %s493 = sand.u32 1, 7
        %s494 = ssub.s32 1, %s493
        %s495 = scalar_lea.vmem %s467, %s494
        %s496 = ssub.s32 1, %s493
        %s497 = scalar_lea.vmem %s468, %s496 [#allocation2]
        %s498 = sshllo.u32 0, %s493
        loop: start=0, step=1, limit=1
        $region291: #{tpu_custom_call.1} parent=289 // loop_pre_header
          _
        $region292: #{tpu_custom_call.1} parent=289 // loop_header
          %s500 = sphi 0, %s504
          %p501 = scmp.ge.s32.totalorder %s500, 1
          %s505 = sphi %s495, %s495
          %s506 = sphi %s497, %s497
        $region293: #{tpu_custom_call.1} parent=289 // loop_header_branch
          %503 = sbr.rel (%p501) target = $region297
        $region294: #{tpu_custom_call.1} parent=289 // loop_body
          %v507 = vld [vmem:[%s505] sm:%s498]
          %508 = vst [vmem:[%s506] sm:%s498] %v507
        $region295: #{tpu_custom_call.1} parent=289 // loop_footer
          %s504 = sadd.s32 1, %s500
        $region296: #{tpu_custom_call.1} parent=289 // loop_footer_branch
          %499 = sbr.rel target = $region292
        $region297: #{tpu_custom_call.1} parent=289 // loop_exit
          _
      $region290: #{tpu_custom_call.1} parent=274 // pred_fallthru
        _
    $region275: #{tpu_custom_call.1} parent=1 // pred_fallthru
      _
    // Predicated region
    $region276: #{tpu_custom_call.1} parent=1 // pred_check
      %p474 = pneg %p470
    $region277: #{tpu_custom_call.1} parent=1 // pred_check_branch
      %476 = sbr.rel (%p474) target = $region279
    $region278: #{tpu_custom_call.1} parent=1 // pred_region
      %s477 = sshllo.u32 0, 1
      loop: start=0, step=1, limit=1
      $region280: #{tpu_custom_call.1} parent=278 // loop_pre_header
        _
      $region281: #{tpu_custom_call.1} parent=278 // loop_header
        %s479 = sphi 0, %s483
        %p480 = scmp.ge.s32.totalorder %s479, 1
        %s484 = sphi %s467, %s467
        %s485 = sphi %s468, %s468
      $region282: #{tpu_custom_call.1} parent=278 // loop_header_branch
        %482 = sbr.rel (%p480) target = $region286
      $region283: #{tpu_custom_call.1} parent=278 // loop_body
        %v486 = vld [vmem:[%s484] sm:%s477]
        %487 = vst [vmem:[%s485] sm:%s477] %v486
      $region284: #{tpu_custom_call.1} parent=278 // loop_footer
        %s483 = sadd.s32 1, %s479
      $region285: #{tpu_custom_call.1} parent=278 // loop_footer_branch
        %478 = sbr.rel target = $region281
      $region286: #{tpu_custom_call.1} parent=278 // loop_exit
        _
    $region279: #{tpu_custom_call.1} parent=1 // pred_fallthru
      _
    // Predicated region
    $region298: #{tpu_custom_call.1} parent=1 // pred_check
      _
    $region299: #{tpu_custom_call.1} parent=1 // pred_check_branch
      %511 = sbr.rel (0) target = $region301
    $region300: #{tpu_custom_call.1} parent=1 // pred_region
      %512 = vsyncadd [#allocation3], 16
    $region301: #{tpu_custom_call.1} parent=1 // pred_fallthru
      _
    %s513 = sadd.s32 %s14, 10
    %p514 = scmp.lt.s32.totalorder %s513, 15
    %s515 = scalar_select %p514, %s513, 15
    %s516 = sld [smem:[#allocation5 + %s515]]
    %s517 = scalar_lea.vmem %s1, %s516
    %s518 = scalar_lea.vmem [#allocation2], 10
    %p520 = scmp.lt.u32.totalorder 1, 8
    %p521 = pneg %p520
    // Predicated region
    $region302: #{tpu_custom_call.1} parent=1 // pred_check
      _
    $region303: #{tpu_custom_call.1} parent=1 // pred_check_branch
      %523 = sbr.rel (%p520) target = $region305
    $region304: #{tpu_custom_call.1} parent=1 // pred_region
      %s538 = sand.u32 1, 7
      %p539 = scmp.eq.s32.totalorder %s538, 0
      %p540 = pneg %p539
      // Predicated region
      $region317: #{tpu_custom_call.1} parent=304 // pred_check
        _
      $region318: #{tpu_custom_call.1} parent=304 // pred_check_branch
        %542 = sbr.rel (%p539) target = $region320
      $region319: #{tpu_custom_call.1} parent=304 // pred_region
        %s543 = sand.u32 1, 7
        %s544 = ssub.s32 1, %s543
        %s545 = scalar_lea.vmem %s517, %s544
        %s546 = ssub.s32 1, %s543
        %s547 = scalar_lea.vmem %s518, %s546 [#allocation2]
        %s548 = sshllo.u32 0, %s543
        loop: start=0, step=1, limit=1
        $region321: #{tpu_custom_call.1} parent=319 // loop_pre_header
          _
        $region322: #{tpu_custom_call.1} parent=319 // loop_header
          %s550 = sphi 0, %s554
          %p551 = scmp.ge.s32.totalorder %s550, 1
          %s555 = sphi %s545, %s545
          %s556 = sphi %s547, %s547
        $region323: #{tpu_custom_call.1} parent=319 // loop_header_branch
          %553 = sbr.rel (%p551) target = $region327
        $region324: #{tpu_custom_call.1} parent=319 // loop_body
          %v557 = vld [vmem:[%s555] sm:%s548]
          %558 = vst [vmem:[%s556] sm:%s548] %v557
        $region325: #{tpu_custom_call.1} parent=319 // loop_footer
          %s554 = sadd.s32 1, %s550
        $region326: #{tpu_custom_call.1} parent=319 // loop_footer_branch
          %549 = sbr.rel target = $region322
        $region327: #{tpu_custom_call.1} parent=319 // loop_exit
          _
      $region320: #{tpu_custom_call.1} parent=304 // pred_fallthru
        _
    $region305: #{tpu_custom_call.1} parent=1 // pred_fallthru
      _
    // Predicated region
    $region306: #{tpu_custom_call.1} parent=1 // pred_check
      %p524 = pneg %p520
    $region307: #{tpu_custom_call.1} parent=1 // pred_check_branch
      %526 = sbr.rel (%p524) target = $region309
    $region308: #{tpu_custom_call.1} parent=1 // pred_region
      %s527 = sshllo.u32 0, 1
      loop: start=0, step=1, limit=1
      $region310: #{tpu_custom_call.1} parent=308 // loop_pre_header
        _
      $region311: #{tpu_custom_call.1} parent=308 // loop_header
        %s529 = sphi 0, %s533
        %p530 = scmp.ge.s32.totalorder %s529, 1
        %s534 = sphi %s517, %s517
        %s535 = sphi %s518, %s518
      $region312: #{tpu_custom_call.1} parent=308 // loop_header_branch
        %532 = sbr.rel (%p530) target = $region316
      $region313: #{tpu_custom_call.1} parent=308 // loop_body
        %v536 = vld [vmem:[%s534] sm:%s527]
        %537 = vst [vmem:[%s535] sm:%s527] %v536
      $region314: #{tpu_custom_call.1} parent=308 // loop_footer
        %s533 = sadd.s32 1, %s529
      $region315: #{tpu_custom_call.1} parent=308 // loop_footer_branch
        %528 = sbr.rel target = $region311
      $region316: #{tpu_custom_call.1} parent=308 // loop_exit
        _
    $region309: #{tpu_custom_call.1} parent=1 // pred_fallthru
      _
    // Predicated region
    $region328: #{tpu_custom_call.1} parent=1 // pred_check
      _
    $region329: #{tpu_custom_call.1} parent=1 // pred_check_branch
      %561 = sbr.rel (0) target = $region331
    $region330: #{tpu_custom_call.1} parent=1 // pred_region
      %562 = vsyncadd [#allocation3], 16
    $region331: #{tpu_custom_call.1} parent=1 // pred_fallthru
      _
    %s563 = sadd.s32 %s14, 11
    %p564 = scmp.lt.s32.totalorder %s563, 15
    %s565 = scalar_select %p564, %s563, 15
    %s566 = sld [smem:[#allocation5 + %s565]]
    %s567 = scalar_lea.vmem %s1, %s566
    %s568 = scalar_lea.vmem [#allocation2], 11
    %p570 = scmp.lt.u32.totalorder 1, 8
    %p571 = pneg %p570
    // Predicated region
    $region332: #{tpu_custom_call.1} parent=1 // pred_check
      _
    $region333: #{tpu_custom_call.1} parent=1 // pred_check_branch
      %573 = sbr.rel (%p570) target = $region335
    $region334: #{tpu_custom_call.1} parent=1 // pred_region
      %s588 = sand.u32 1, 7
      %p589 = scmp.eq.s32.totalorder %s588, 0
      %p590 = pneg %p589
      // Predicated region
      $region347: #{tpu_custom_call.1} parent=334 // pred_check
        _
      $region348: #{tpu_custom_call.1} parent=334 // pred_check_branch
        %592 = sbr.rel (%p589) target = $region350
      $region349: #{tpu_custom_call.1} parent=334 // pred_region
        %s593 = sand.u32 1, 7
        %s594 = ssub.s32 1, %s593
        %s595 = scalar_lea.vmem %s567, %s594
        %s596 = ssub.s32 1, %s593
        %s597 = scalar_lea.vmem %s568, %s596 [#allocation2]
        %s598 = sshllo.u32 0, %s593
        loop: start=0, step=1, limit=1
        $region351: #{tpu_custom_call.1} parent=349 // loop_pre_header
          _
        $region352: #{tpu_custom_call.1} parent=349 // loop_header
          %s600 = sphi 0, %s604
          %p601 = scmp.ge.s32.totalorder %s600, 1
          %s605 = sphi %s595, %s595
          %s606 = sphi %s597, %s597
        $region353: #{tpu_custom_call.1} parent=349 // loop_header_branch
          %603 = sbr.rel (%p601) target = $region357
        $region354: #{tpu_custom_call.1} parent=349 // loop_body
          %v607 = vld [vmem:[%s605] sm:%s598]
          %608 = vst [vmem:[%s606] sm:%s598] %v607
        $region355: #{tpu_custom_call.1} parent=349 // loop_footer
          %s604 = sadd.s32 1, %s600
        $region356: #{tpu_custom_call.1} parent=349 // loop_footer_branch
          %599 = sbr.rel target = $region352
        $region357: #{tpu_custom_call.1} parent=349 // loop_exit
          _
      $region350: #{tpu_custom_call.1} parent=334 // pred_fallthru
        _
    $region335: #{tpu_custom_call.1} parent=1 // pred_fallthru
      _
    // Predicated region
    $region336: #{tpu_custom_call.1} parent=1 // pred_check
      %p574 = pneg %p570
    $region337: #{tpu_custom_call.1} parent=1 // pred_check_branch
      %576 = sbr.rel (%p574) target = $region339
    $region338: #{tpu_custom_call.1} parent=1 // pred_region
      %s577 = sshllo.u32 0, 1
      loop: start=0, step=1, limit=1
      $region340: #{tpu_custom_call.1} parent=338 // loop_pre_header
        _
      $region341: #{tpu_custom_call.1} parent=338 // loop_header
        %s579 = sphi 0, %s583
        %p580 = scmp.ge.s32.totalorder %s579, 1
        %s584 = sphi %s567, %s567
        %s585 = sphi %s568, %s568
      $region342: #{tpu_custom_call.1} parent=338 // loop_header_branch
        %582 = sbr.rel (%p580) target = $region346
      $region343: #{tpu_custom_call.1} parent=338 // loop_body
        %v586 = vld [vmem:[%s584] sm:%s577]
        %587 = vst [vmem:[%s585] sm:%s577] %v586
      $region344: #{tpu_custom_call.1} parent=338 // loop_footer
        %s583 = sadd.s32 1, %s579
      $region345: #{tpu_custom_call.1} parent=338 // loop_footer_branch
        %578 = sbr.rel target = $region341
      $region346: #{tpu_custom_call.1} parent=338 // loop_exit
        _
    $region339: #{tpu_custom_call.1} parent=1 // pred_fallthru
      _
    // Predicated region
    $region358: #{tpu_custom_call.1} parent=1 // pred_check
      _
    $region359: #{tpu_custom_call.1} parent=1 // pred_check_branch
      %611 = sbr.rel (0) target = $region361
    $region360: #{tpu_custom_call.1} parent=1 // pred_region
      %612 = vsyncadd [#allocation3], 16
    $region361: #{tpu_custom_call.1} parent=1 // pred_fallthru
      _
    %s613 = sadd.s32 %s14, 12
    %p614 = scmp.lt.s32.totalorder %s613, 15
    %s615 = scalar_select %p614, %s613, 15
    %s616 = sld [smem:[#allocation5 + %s615]]
    %s617 = scalar_lea.vmem %s1, %s616
    %s618 = scalar_lea.vmem [#allocation2], 12
    %p620 = scmp.lt.u32.totalorder 1, 8
    %p621 = pneg %p620
    // Predicated region
    $region362: #{tpu_custom_call.1} parent=1 // pred_check
      _
    $region363: #{tpu_custom_call.1} parent=1 // pred_check_branch
      %623 = sbr.rel (%p620) target = $region365
    $region364: #{tpu_custom_call.1} parent=1 // pred_region
      %s638 = sand.u32 1, 7
      %p639 = scmp.eq.s32.totalorder %s638, 0
      %p640 = pneg %p639
      // Predicated region
      $region377: #{tpu_custom_call.1} parent=364 // pred_check
        _
      $region378: #{tpu_custom_call.1} parent=364 // pred_check_branch
        %642 = sbr.rel (%p639) target = $region380
      $region379: #{tpu_custom_call.1} parent=364 // pred_region
        %s643 = sand.u32 1, 7
        %s644 = ssub.s32 1, %s643
        %s645 = scalar_lea.vmem %s617, %s644
        %s646 = ssub.s32 1, %s643
        %s647 = scalar_lea.vmem %s618, %s646 [#allocation2]
        %s648 = sshllo.u32 0, %s643
        loop: start=0, step=1, limit=1
        $region381: #{tpu_custom_call.1} parent=379 // loop_pre_header
          _
        $region382: #{tpu_custom_call.1} parent=379 // loop_header
          %s650 = sphi 0, %s654
          %p651 = scmp.ge.s32.totalorder %s650, 1
          %s655 = sphi %s645, %s645
          %s656 = sphi %s647, %s647
        $region383: #{tpu_custom_call.1} parent=379 // loop_header_branch
          %653 = sbr.rel (%p651) target = $region387
        $region384: #{tpu_custom_call.1} parent=379 // loop_body
          %v657 = vld [vmem:[%s655] sm:%s648]
          %658 = vst [vmem:[%s656] sm:%s648] %v657
        $region385: #{tpu_custom_call.1} parent=379 // loop_footer
          %s654 = sadd.s32 1, %s650
        $region386: #{tpu_custom_call.1} parent=379 // loop_footer_branch
          %649 = sbr.rel target = $region382
        $region387: #{tpu_custom_call.1} parent=379 // loop_exit
          _
      $region380: #{tpu_custom_call.1} parent=364 // pred_fallthru
        _
    $region365: #{tpu_custom_call.1} parent=1 // pred_fallthru
      _
    // Predicated region
    $region366: #{tpu_custom_call.1} parent=1 // pred_check
      %p624 = pneg %p620
    $region367: #{tpu_custom_call.1} parent=1 // pred_check_branch
      %626 = sbr.rel (%p624) target = $region369
    $region368: #{tpu_custom_call.1} parent=1 // pred_region
      %s627 = sshllo.u32 0, 1
      loop: start=0, step=1, limit=1
      $region370: #{tpu_custom_call.1} parent=368 // loop_pre_header
        _
      $region371: #{tpu_custom_call.1} parent=368 // loop_header
        %s629 = sphi 0, %s633
        %p630 = scmp.ge.s32.totalorder %s629, 1
        %s634 = sphi %s617, %s617
        %s635 = sphi %s618, %s618
      $region372: #{tpu_custom_call.1} parent=368 // loop_header_branch
        %632 = sbr.rel (%p630) target = $region376
      $region373: #{tpu_custom_call.1} parent=368 // loop_body
        %v636 = vld [vmem:[%s634] sm:%s627]
        %637 = vst [vmem:[%s635] sm:%s627] %v636
      $region374: #{tpu_custom_call.1} parent=368 // loop_footer
        %s633 = sadd.s32 1, %s629
      $region375: #{tpu_custom_call.1} parent=368 // loop_footer_branch
        %628 = sbr.rel target = $region371
      $region376: #{tpu_custom_call.1} parent=368 // loop_exit
        _
    $region369: #{tpu_custom_call.1} parent=1 // pred_fallthru
      _
    // Predicated region
    $region388: #{tpu_custom_call.1} parent=1 // pred_check
      _
    $region389: #{tpu_custom_call.1} parent=1 // pred_check_branch
      %661 = sbr.rel (0) target = $region391
    $region390: #{tpu_custom_call.1} parent=1 // pred_region
      %662 = vsyncadd [#allocation3], 16
    $region391: #{tpu_custom_call.1} parent=1 // pred_fallthru
      _
    %s663 = sadd.s32 %s14, 13
    %p664 = scmp.lt.s32.totalorder %s663, 15
    %s665 = scalar_select %p664, %s663, 15
    %s666 = sld [smem:[#allocation5 + %s665]]
    %s667 = scalar_lea.vmem %s1, %s666
    %s668 = scalar_lea.vmem [#allocation2], 13
    %p670 = scmp.lt.u32.totalorder 1, 8
    %p671 = pneg %p670
    // Predicated region
    $region392: #{tpu_custom_call.1} parent=1 // pred_check
      _
    $region393: #{tpu_custom_call.1} parent=1 // pred_check_branch
      %673 = sbr.rel (%p670) target = $region395
    $region394: #{tpu_custom_call.1} parent=1 // pred_region
      %s688 = sand.u32 1, 7
      %p689 = scmp.eq.s32.totalorder %s688, 0
      %p690 = pneg %p689
      // Predicated region
      $region407: #{tpu_custom_call.1} parent=394 // pred_check
        _
      $region408: #{tpu_custom_call.1} parent=394 // pred_check_branch
        %692 = sbr.rel (%p689) target = $region410
      $region409: #{tpu_custom_call.1} parent=394 // pred_region
        %s693 = sand.u32 1, 7
        %s694 = ssub.s32 1, %s693
        %s695 = scalar_lea.vmem %s667, %s694
        %s696 = ssub.s32 1, %s693
        %s697 = scalar_lea.vmem %s668, %s696 [#allocation2]
        %s698 = sshllo.u32 0, %s693
        loop: start=0, step=1, limit=1
        $region411: #{tpu_custom_call.1} parent=409 // loop_pre_header
          _
        $region412: #{tpu_custom_call.1} parent=409 // loop_header
          %s700 = sphi 0, %s704
          %p701 = scmp.ge.s32.totalorder %s700, 1
          %s705 = sphi %s695, %s695
          %s706 = sphi %s697, %s697
        $region413: #{tpu_custom_call.1} parent=409 // loop_header_branch
          %703 = sbr.rel (%p701) target = $region417
        $region414: #{tpu_custom_call.1} parent=409 // loop_body
          %v707 = vld [vmem:[%s705] sm:%s698]
          %708 = vst [vmem:[%s706] sm:%s698] %v707
        $region415: #{tpu_custom_call.1} parent=409 // loop_footer
          %s704 = sadd.s32 1, %s700
        $region416: #{tpu_custom_call.1} parent=409 // loop_footer_branch
          %699 = sbr.rel target = $region412
        $region417: #{tpu_custom_call.1} parent=409 // loop_exit
          _
      $region410: #{tpu_custom_call.1} parent=394 // pred_fallthru
        _
    $region395: #{tpu_custom_call.1} parent=1 // pred_fallthru
      _
    // Predicated region
    $region396: #{tpu_custom_call.1} parent=1 // pred_check
      %p674 = pneg %p670
    $region397: #{tpu_custom_call.1} parent=1 // pred_check_branch
      %676 = sbr.rel (%p674) target = $region399
    $region398: #{tpu_custom_call.1} parent=1 // pred_region
      %s677 = sshllo.u32 0, 1
      loop: start=0, step=1, limit=1
      $region400: #{tpu_custom_call.1} parent=398 // loop_pre_header
        _
      $region401: #{tpu_custom_call.1} parent=398 // loop_header
        %s679 = sphi 0, %s683
        %p680 = scmp.ge.s32.totalorder %s679, 1
        %s684 = sphi %s667, %s667
        %s685 = sphi %s668, %s668
      $region402: #{tpu_custom_call.1} parent=398 // loop_header_branch
        %682 = sbr.rel (%p680) target = $region406
      $region403: #{tpu_custom_call.1} parent=398 // loop_body
        %v686 = vld [vmem:[%s684] sm:%s677]
        %687 = vst [vmem:[%s685] sm:%s677] %v686
      $region404: #{tpu_custom_call.1} parent=398 // loop_footer
        %s683 = sadd.s32 1, %s679
      $region405: #{tpu_custom_call.1} parent=398 // loop_footer_branch
        %678 = sbr.rel target = $region401
      $region406: #{tpu_custom_call.1} parent=398 // loop_exit
        _
    $region399: #{tpu_custom_call.1} parent=1 // pred_fallthru
      _
    // Predicated region
    $region418: #{tpu_custom_call.1} parent=1 // pred_check
      _
    $region419: #{tpu_custom_call.1} parent=1 // pred_check_branch
      %711 = sbr.rel (0) target = $region421
    $region420: #{tpu_custom_call.1} parent=1 // pred_region
      %712 = vsyncadd [#allocation3], 16
    $region421: #{tpu_custom_call.1} parent=1 // pred_fallthru
      _
    %s713 = sadd.s32 %s14, 14
    %p714 = scmp.lt.s32.totalorder %s713, 15
    %s715 = scalar_select %p714, %s713, 15
    %s716 = sld [smem:[#allocation5 + %s715]]
    %s717 = scalar_lea.vmem %s1, %s716
    %s718 = scalar_lea.vmem [#allocation2], 14
    %p720 = scmp.lt.u32.totalorder 1, 8
    %p721 = pneg %p720
    // Predicated region
    $region422: #{tpu_custom_call.1} parent=1 // pred_check
      _
    $region423: #{tpu_custom_call.1} parent=1 // pred_check_branch
      %723 = sbr.rel (%p720) target = $region425
    $region424: #{tpu_custom_call.1} parent=1 // pred_region
      %s738 = sand.u32 1, 7
      %p739 = scmp.eq.s32.totalorder %s738, 0
      %p740 = pneg %p739
      // Predicated region
      $region437: #{tpu_custom_call.1} parent=424 // pred_check
        _
      $region438: #{tpu_custom_call.1} parent=424 // pred_check_branch
        %742 = sbr.rel (%p739) target = $region440
      $region439: #{tpu_custom_call.1} parent=424 // pred_region
        %s743 = sand.u32 1, 7
        %s744 = ssub.s32 1, %s743
        %s745 = scalar_lea.vmem %s717, %s744
        %s746 = ssub.s32 1, %s743
        %s747 = scalar_lea.vmem %s718, %s746 [#allocation2]
        %s748 = sshllo.u32 0, %s743
        loop: start=0, step=1, limit=1
        $region441: #{tpu_custom_call.1} parent=439 // loop_pre_header
          _
        $region442: #{tpu_custom_call.1} parent=439 // loop_header
          %s750 = sphi 0, %s754
          %p751 = scmp.ge.s32.totalorder %s750, 1
          %s755 = sphi %s745, %s745
          %s756 = sphi %s747, %s747
        $region443: #{tpu_custom_call.1} parent=439 // loop_header_branch
          %753 = sbr.rel (%p751) target = $region447
        $region444: #{tpu_custom_call.1} parent=439 // loop_body
          %v757 = vld [vmem:[%s755] sm:%s748]
          %758 = vst [vmem:[%s756] sm:%s748] %v757
        $region445: #{tpu_custom_call.1} parent=439 // loop_footer
          %s754 = sadd.s32 1, %s750
        $region446: #{tpu_custom_call.1} parent=439 // loop_footer_branch
          %749 = sbr.rel target = $region442
        $region447: #{tpu_custom_call.1} parent=439 // loop_exit
          _
      $region440: #{tpu_custom_call.1} parent=424 // pred_fallthru
        _
    $region425: #{tpu_custom_call.1} parent=1 // pred_fallthru
      _
    // Predicated region
    $region426: #{tpu_custom_call.1} parent=1 // pred_check
      %p724 = pneg %p720
    $region427: #{tpu_custom_call.1} parent=1 // pred_check_branch
      %726 = sbr.rel (%p724) target = $region429
    $region428: #{tpu_custom_call.1} parent=1 // pred_region
      %s727 = sshllo.u32 0, 1
      loop: start=0, step=1, limit=1
      $region430: #{tpu_custom_call.1} parent=428 // loop_pre_header
        _
      $region431: #{tpu_custom_call.1} parent=428 // loop_header
        %s729 = sphi 0, %s733
        %p730 = scmp.ge.s32.totalorder %s729, 1
        %s734 = sphi %s717, %s717
        %s735 = sphi %s718, %s718
      $region432: #{tpu_custom_call.1} parent=428 // loop_header_branch
        %732 = sbr.rel (%p730) target = $region436
      $region433: #{tpu_custom_call.1} parent=428 // loop_body
        %v736 = vld [vmem:[%s734] sm:%s727]
        %737 = vst [vmem:[%s735] sm:%s727] %v736
      $region434: #{tpu_custom_call.1} parent=428 // loop_footer
        %s733 = sadd.s32 1, %s729
      $region435: #{tpu_custom_call.1} parent=428 // loop_footer_branch
        %728 = sbr.rel target = $region431
      $region436: #{tpu_custom_call.1} parent=428 // loop_exit
        _
    $region429: #{tpu_custom_call.1} parent=1 // pred_fallthru
      _
    // Predicated region
    $region448: #{tpu_custom_call.1} parent=1 // pred_check
      _
    $region449: #{tpu_custom_call.1} parent=1 // pred_check_branch
      %761 = sbr.rel (0) target = $region451
    $region450: #{tpu_custom_call.1} parent=1 // pred_region
      %762 = vsyncadd [#allocation3], 16
    $region451: #{tpu_custom_call.1} parent=1 // pred_fallthru
      _
    %s763 = sadd.s32 %s14, 15
    %p764 = scmp.lt.s32.totalorder %s763, 15
    %s765 = scalar_select %p764, %s763, 15
    %s766 = sld [smem:[#allocation5 + %s765]]
    %s767 = scalar_lea.vmem %s1, %s766
    %s768 = scalar_lea.vmem [#allocation2], 15
    %p770 = scmp.lt.u32.totalorder 1, 8
    %p771 = pneg %p770
    // Predicated region
    $region452: #{tpu_custom_call.1} parent=1 // pred_check
      _
    $region453: #{tpu_custom_call.1} parent=1 // pred_check_branch
      %773 = sbr.rel (%p770) target = $region455
    $region454: #{tpu_custom_call.1} parent=1 // pred_region
      %s788 = sand.u32 1, 7
      %p789 = scmp.eq.s32.totalorder %s788, 0
      %p790 = pneg %p789
      // Predicated region
      $region467: #{tpu_custom_call.1} parent=454 // pred_check
        _
      $region468: #{tpu_custom_call.1} parent=454 // pred_check_branch
        %792 = sbr.rel (%p789) target = $region470
      $region469: #{tpu_custom_call.1} parent=454 // pred_region
        %s793 = sand.u32 1, 7
        %s794 = ssub.s32 1, %s793
        %s795 = scalar_lea.vmem %s767, %s794
        %s796 = ssub.s32 1, %s793
        %s797 = scalar_lea.vmem %s768, %s796 [#allocation2]
        %s798 = sshllo.u32 0, %s793
        loop: start=0, step=1, limit=1
        $region471: #{tpu_custom_call.1} parent=469 // loop_pre_header
          _
        $region472: #{tpu_custom_call.1} parent=469 // loop_header
          %s800 = sphi 0, %s804
          %p801 = scmp.ge.s32.totalorder %s800, 1
          %s805 = sphi %s795, %s795
          %s806 = sphi %s797, %s797
        $region473: #{tpu_custom_call.1} parent=469 // loop_header_branch
          %803 = sbr.rel (%p801) target = $region477
        $region474: #{tpu_custom_call.1} parent=469 // loop_body
          %v807 = vld [vmem:[%s805] sm:%s798]
          %808 = vst [vmem:[%s806] sm:%s798] %v807
        $region475: #{tpu_custom_call.1} parent=469 // loop_footer
          %s804 = sadd.s32 1, %s800
        $region476: #{tpu_custom_call.1} parent=469 // loop_footer_branch
          %799 = sbr.rel target = $region472
        $region477: #{tpu_custom_call.1} parent=469 // loop_exit
          _
      $region470: #{tpu_custom_call.1} parent=454 // pred_fallthru
        _
    $region455: #{tpu_custom_call.1} parent=1 // pred_fallthru
      _
    // Predicated region
    $region456: #{tpu_custom_call.1} parent=1 // pred_check
      %p774 = pneg %p770
    $region457: #{tpu_custom_call.1} parent=1 // pred_check_branch
      %776 = sbr.rel (%p774) target = $region459
    $region458: #{tpu_custom_call.1} parent=1 // pred_region
      %s777 = sshllo.u32 0, 1
      loop: start=0, step=1, limit=1
      $region460: #{tpu_custom_call.1} parent=458 // loop_pre_header
        _
      $region461: #{tpu_custom_call.1} parent=458 // loop_header
        %s779 = sphi 0, %s783
        %p780 = scmp.ge.s32.totalorder %s779, 1
        %s784 = sphi %s767, %s767
        %s785 = sphi %s768, %s768
      $region462: #{tpu_custom_call.1} parent=458 // loop_header_branch
        %782 = sbr.rel (%p780) target = $region466
      $region463: #{tpu_custom_call.1} parent=458 // loop_body
        %v786 = vld [vmem:[%s784] sm:%s777]
        %787 = vst [vmem:[%s785] sm:%s777] %v786
      $region464: #{tpu_custom_call.1} parent=458 // loop_footer
        %s783 = sadd.s32 1, %s779
      $region465: #{tpu_custom_call.1} parent=458 // loop_footer_branch
        %778 = sbr.rel target = $region461
      $region466: #{tpu_custom_call.1} parent=458 // loop_exit
        _
    $region459: #{tpu_custom_call.1} parent=1 // pred_fallthru
      _
    // Predicated region
    $region478: #{tpu_custom_call.1} parent=1 // pred_check
      _
    $region479: #{tpu_custom_call.1} parent=1 // pred_check_branch
      %811 = sbr.rel (0) target = $region481
    $region480: #{tpu_custom_call.1} parent=1 // pred_region
      %812 = vsyncadd [#allocation3], 16
    $region481: #{tpu_custom_call.1} parent=1 // pred_fallthru
      _
    %s813 = smul.u32 1, 1
    %s814 = sshll.u32 %s813, 4
    %815 = dma.done [#allocation3], %s814
    %s816 = sshll.u32 %s813, 4
    %817 = dma.done [#allocation3], %s816
    %s818 = sshll.u32 %s813, 4
    %819 = dma.done [#allocation3], %s818
    %s820 = sshll.u32 %s813, 4
    %821 = dma.done [#allocation3], %s820
    %s822 = sshll.u32 %s813, 4
    %823 = dma.done [#allocation3], %s822
    %s824 = sshll.u32 %s813, 4
    %825 = dma.done [#allocation3], %s824
    %s826 = sshll.u32 %s813, 4
    %827 = dma.done [#allocation3], %s826
    %s828 = sshll.u32 %s813, 4
    %829 = dma.done [#allocation3], %s828
    %s830 = sshll.u32 %s813, 4
    %831 = dma.done [#allocation3], %s830
    %s832 = sshll.u32 %s813, 4
    %833 = dma.done [#allocation3], %s832
    %s834 = sshll.u32 %s813, 4
    %835 = dma.done [#allocation3], %s834
    %s836 = sshll.u32 %s813, 4
    %837 = dma.done [#allocation3], %s836
    %s838 = sshll.u32 %s813, 4
    %839 = dma.done [#allocation3], %s838
    %s840 = sshll.u32 %s813, 4
    %841 = dma.done [#allocation3], %s840
    %s842 = sshll.u32 %s813, 4
    %843 = dma.done [#allocation3], %s842
    %s844 = sshll.u32 %s813, 4
    %845 = dma.done [#allocation3], %s844
    %v846 = vld [vmem:[#allocation2] sm:$0xff]
    %v847 = vld [vmem:[#allocation2 + $0x8] sm:$0xff]
    %v848 = vmul.f32 %v846, 5.656854
    %v849 = vmul.f32 %v847, 5.656854
    %vm850 = vcmask 261120
    %851 = vst.msk [vmem:[#allocation6] sm:$0xff] %vm850, %v848
    %852 = vst.msk [vmem:[#allocation6 + $0x8] sm:$0xff] %vm850, %v849
    // Predicated region
    $region482: #{tpu_custom_call.1} parent=1 // pred_check
      _
    $region483: #{tpu_custom_call.1} parent=1 // pred_check_branch
      %854 = sbr.rel (0) target = $region485
    $region484: #{tpu_custom_call.1} parent=1 // pred_region
      %s856 = ssub.s32 256, 256
      %857 = vsyncadd [#allocation7], %s856
      %s858 = sshll.u32 [#allocation6], 4
      %s859 = int_to_ptr.vmem [resolvable:$true] %s858
      %864 = dma.vmem_to_hbm [thread:$0]  %s859, 256, %s2, [#allocation7], 128, 128, 8
    $region485: #{tpu_custom_call.1} parent=1 // pred_fallthru
      _
    // Predicated region
    $region486: #{tpu_custom_call.1} parent=1 // pred_check
      _
    $region487: #{tpu_custom_call.1} parent=1 // pred_check_branch
      %866 = sbr.rel (0) target = $region489
    $region488: #{tpu_custom_call.1} parent=1 // pred_region
      %867 = dma.done [#allocation7], 256
    $region489: #{tpu_custom_call.1} parent=1 // pred_fallthru
      _
    %868 = vsyncpa [#allocation7], 1
  %869 = vsyncmov [#allocation3]
  %s870 = vpop.sfrf %869
  %p871 = scmp.eq.s32.totalorder %s870, 0
  %p872 = pneg %p871
  %874 = shalt.err (%p872)

</llo_original>
